<compile_context>
chip_gen: v7x
topology: tpu7x:2x2x1
jax: 0.10.0
libtpu: 0.0.40
codegen_flags: <defaults>
</compile_context>

<pallas_src>
import functools
import math

import jax
import jax.numpy as jnp
from jax import lax
from jax.experimental import pallas as pl
from jax.experimental.pallas import tpu as pltpu


def _mha_self_attn_kernel(x_ref, wqkv_ref, bqkv_ref, wo_ref, bo_ref, o_ref,
                          *, num_heads, head_dim):
    """One batch element per grid step; fused QKV proj + attention + out proj.

    x_ref    : (1, T, E)  bf16 input rows for this batch element
    wqkv_ref : (E, 3E)    bf16, transposed for x @ W; q-scaling folded in
    bqkv_ref : (1, 3E)    f32 bias, q-scaling folded in
    wo_ref   : (E, E)     bf16 out_proj weight, transposed for x @ W
    bo_ref   : (1, E)     f32 out_proj bias
    o_ref    : (1, T, E)  f32 output
    """
    embed = num_heads * head_dim

    x = x_ref[0]                                             # (T, E) bf16

    # Fused QKV projection: single MXU matmul, contraction E, output lanes 3E.
    qkv = jnp.dot(x, wqkv_ref[...], preferred_element_type=jnp.float32)
    qkv = qkv + bqkv_ref[...]                                # (T, 3E) f32

    q = qkv[:, :embed]              # scaling already folded into W/b
    k = qkv[:, embed:2 * embed]
    v = qkv[:, 2 * embed:]

    # Per-head attention (static small loop; slices are 128-aligned lanes).
    head_outs = []
    for h in range(num_heads):
        sl = slice(h * head_dim, (h + 1) * head_dim)
        q_h = q[:, sl].astype(jnp.bfloat16)                  # (T, d)
        k_h = k[:, sl].astype(jnp.bfloat16)                  # (T, d)
        v_h = v[:, sl].astype(jnp.bfloat16)                  # (T, d)

        # scores: (T, T); contract last dim of both ("nt" matmul, no transpose)
        s = lax.dot_general(q_h, k_h, (((1,), (1,)), ((), ())),
                            preferred_element_type=jnp.float32)

        # numerically-stable softmax in f32 (matches F.softmax)
        s_max = jnp.max(s, axis=-1, keepdims=True)
        e = jnp.exp(s - s_max)
        p = e / jnp.sum(e, axis=-1, keepdims=True)
        # TODO(synk): attention-prob dropout (p>0) not implemented (default 0.0)

        o_h = jnp.dot(p.astype(jnp.bfloat16), v_h,
                      preferred_element_type=jnp.float32)    # (T, d) f32
        head_outs.append(o_h)

    attn = jnp.concatenate(head_outs, axis=-1)               # (T, E) f32

    # Output projection: single contraction over E.
    out = jnp.dot(attn.astype(jnp.bfloat16), wo_ref[...],
                  preferred_element_type=jnp.float32)
    out = out + bo_ref[...]                                  # (T, E) + (1, E)
    o_ref[0] = out.astype(o_ref.dtype)


def multihead_self_attention(query_tbe, in_proj_weight, in_proj_bias,
                             out_proj_weight, out_proj_bias, *, num_heads):
    """Forward of MultiheadAttention(self_attention=True), seq-first layout.

    query_tbe       : (T, B, E) float32
    in_proj_weight  : (3E, E)   (PyTorch F.linear layout: y = x @ W.T + b)
    in_proj_bias    : (3E,)
    out_proj_weight : (E, E)
    out_proj_bias   : (E,)
    Returns the attention output, shape (T, B, E).
    TODO(synk): head-averaged attn_weights / attn_logits outputs, attn_mask,
    key_padding_mask, bias_k/bias_v, add_zero_attn and incremental_state are
    not implemented (defaults of the module's forward).
    """
    T, B, E = query_tbe.shape
    assert E % num_heads == 0, "embed_dim must be divisible by num_heads"
    head_dim = E // num_heads
    scaling = head_dim ** -0.5

    # (T, B, E) -> (B, T, E): one grid step owns a contiguous (T, E) slab.
    x_bte = jnp.transpose(query_tbe, (1, 0, 2)).astype(jnp.bfloat16)

    # Pre-transpose weights for x @ W; fold the q scaling into Wq / bq so the
    # kernel does no extra VPU pass over the (T, 3E) activation.
    scale_vec = jnp.concatenate([jnp.full((E,), scaling, jnp.float32),
                                 jnp.ones((2 * E,), jnp.float32)])
    w_qkv = jnp.transpose(in_proj_weight, (1, 0)).astype(jnp.float32)   # (E, 3E)
    w_qkv = (w_qkv * scale_vec[None, :]).astype(jnp.bfloat16)
    b_qkv = (in_proj_bias.astype(jnp.float32) * scale_vec).reshape(1, 3 * E)
    w_o = jnp.transpose(out_proj_weight, (1, 0)).astype(jnp.bfloat16)   # (E, E)
    b_o = out_proj_bias.astype(jnp.float32).reshape(1, E)

    kernel = functools.partial(_mha_self_attn_kernel,
                               num_heads=num_heads, head_dim=head_dim)

    out_bte = pl.pallas_call(
        kernel,
        out_shape=jax.ShapeDtypeStruct((B, T, E), query_tbe.dtype),
        grid_spec=pltpu.PrefetchScalarGridSpec(
            num_scalar_prefetch=0,
            grid=(B,),
            in_specs=[
                pl.BlockSpec((1, T, E), lambda b: (b, 0, 0)),      # x
                pl.BlockSpec((E, 3 * E), lambda b: (0, 0)),        # W_qkv
                pl.BlockSpec((1, 3 * E), lambda b: (0, 0)),        # b_qkv
                pl.BlockSpec((E, E), lambda b: (0, 0)),            # W_o
                pl.BlockSpec((1, E), lambda b: (0, 0)),            # b_o
            ],
            out_specs=pl.BlockSpec((1, T, E), lambda b: (b, 0, 0)),
        ),
        compiler_params=pltpu.CompilerParams(
            dimension_semantics=("parallel",)),
    )(x_bte, w_qkv, b_qkv, w_o, b_o)

    # (B, T, E) -> (T, B, E)
    return jnp.transpose(out_bte, (1, 0, 2))


def _reference(query_tbe, in_proj_weight, in_proj_bias,
               out_proj_weight, out_proj_bias, num_heads):
    """Pure-JAX f32 reference matching the PyTorch forward (self-attention)."""
    T, B, E = query_tbe.shape
    d = E // num_heads
    scaling = d ** -0.5

    qkv = jnp.einsum("tbe,fe->tbf", query_tbe, in_proj_weight) + in_proj_bias
    q, k, v = jnp.split(qkv, 3, axis=-1)
    q = q * scaling

    def to_heads(x):                                    # (T,B,E)->(B,H,T,d)
        return jnp.transpose(x.reshape(T, B, num_heads, d), (1, 2, 0, 3))

    qh, kh, vh = to_heads(q), to_heads(k), to_heads(v)
    s = jnp.einsum("bhtd,bhsd->bhts", qh, kh)
    p = jax.nn.softmax(s, axis=-1)
    o = jnp.einsum("bhts,bhsd->bhtd", p, vh)            # (B,H,T,d)
    o = jnp.transpose(o, (2, 0, 1, 3)).reshape(T, B, E)
    return jnp.einsum("tbe,fe->tbf", o, out_proj_weight) + out_proj_bias


def _xavier_uniform(key, shape):
    fan_out, fan_in = shape
    bound = math.sqrt(6.0 / (fan_in + fan_out))
    return jax.random.uniform(key, shape, jnp.float32, -bound, bound)


if __name__ == "__main__":
    key = jax.random.PRNGKey(0)
    # durflex encoder config: hidden=256, 2 heads (head_dim=128) — keeps every
    # lane dim a multiple of 128; small T/B keeps the demo tiny.
    T, B, E, H = 16, 2, 256, 2

    k1, k2, k3, k4, k5 = jax.random.split(key, 5)
    query = jax.random.normal(k1, (T, B, E), dtype=jnp.float32)
    in_proj_weight = _xavier_uniform(k2, (3 * E, E))
    in_proj_bias = 0.02 * jax.random.normal(k3, (3 * E,), dtype=jnp.float32)
    out_proj_weight = _xavier_uniform(k4, (E, E))
    out_proj_bias = 0.02 * jax.random.normal(k5, (E,), dtype=jnp.float32)

    out = multihead_self_attention(query, in_proj_weight, in_proj_bias,
                                   out_proj_weight, out_proj_bias,
                                   num_heads=H)
    out = jax.block_until_ready(out)

    ref = _reference(query, in_proj_weight, in_proj_bias,
                     out_proj_weight, out_proj_bias, H)
    assert out.shape == (T, B, E)
    # bf16 matmul operands with f32 accumulation => relaxed tolerance vs f32 ref
    assert jnp.allclose(out, ref, atol=5e-2, rtol=5e-2), "mismatch vs reference"

    print("KERNEL_OK")
</pallas_src>

<mosaic_0001>
module attributes {stable_mosaic.version = 11 : i64} {
  func.func @_mha_self_attn_kernel(%arg0: i32, %arg1: memref<1x16x256xbf16, #tpu.memory_space<vmem>>, %arg2: memref<256x768xbf16, #tpu.memory_space<vmem>>, %arg3: memref<1x768xf32, #tpu.memory_space<vmem>>, %arg4: memref<256x256xbf16, #tpu.memory_space<vmem>>, %arg5: memref<1x256xf32, #tpu.memory_space<vmem>>, %arg6: memref<1x16x256xf32, #tpu.memory_space<vmem>>) attributes {dimension_semantics = [#tpu.dimension_semantics<parallel>], iteration_bounds = array<i64: 2>, scalar_prefetch = 0 : i64, scratch_operands = 0 : i64, tpu.core_type = #tpu.core_type<tc>, window_params = [{transform_indices = @transform_0, window_bounds = array<i64: 1, 16, 256>}, {pipeline_mode = #tpu.pipeline_mode<synchronous>, transform_indices = @transform_1, window_bounds = array<i64: 256, 768>}, {pipeline_mode = #tpu.pipeline_mode<synchronous>, transform_indices = @transform_2, window_bounds = array<i64: 1, 768>}, {pipeline_mode = #tpu.pipeline_mode<synchronous>, transform_indices = @transform_3, window_bounds = array<i64: 256, 256>}, {pipeline_mode = #tpu.pipeline_mode<synchronous>, transform_indices = @transform_4, window_bounds = array<i64: 1, 256>}, {transform_indices = @transform_5, window_bounds = array<i64: 1, 16, 256>}]} {
    %c0 = arith.constant 0 : index
    %c0_0 = arith.constant 0 : index
    %c0_1 = arith.constant 0 : index
    %0 = vector.load %arg1[%c0, %c0_0, %c0_1] : memref<1x16x256xbf16, #tpu.memory_space<vmem>>, vector<1x16x256xbf16>
    %1 = vector.shape_cast %0 : vector<1x16x256xbf16> to vector<16x256xbf16>
    %c0_2 = arith.constant 0 : index
    %c0_3 = arith.constant 0 : index
    %2 = vector.load %arg2[%c0_2, %c0_3] : memref<256x768xbf16, #tpu.memory_space<vmem>>, vector<256x768xbf16>
    %cst = arith.constant dense<0.000000e+00> : vector<16x768xf32>
    %3 = tpu.matmul %1, %2, %cst {dimension_numbers = #tpu.dot_dimension_numbers<[1], [0], [0], [1], [0, 0, 1, 1], [], []>} : vector<16x256xbf16>, vector<256x768xbf16>, vector<16x768xf32> -> vector<16x768xf32>
    %c0_4 = arith.constant 0 : index
    %c0_5 = arith.constant 0 : index
    %4 = vector.load %arg3[%c0_4, %c0_5] : memref<1x768xf32, #tpu.memory_space<vmem>>, vector<1x768xf32>
    %5 = vector.broadcast %4 : vector<1x768xf32> to vector<16x768xf32>
    %6 = arith.addf %3, %5 : vector<16x768xf32>
    %7 = vector.extract_strided_slice %6 {offsets = [0, 0], sizes = [16, 256], strides = [1, 1]} : vector<16x768xf32> to vector<16x256xf32>
    %8 = vector.extract_strided_slice %6 {offsets = [0, 256], sizes = [16, 256], strides = [1, 1]} : vector<16x768xf32> to vector<16x256xf32>
    %9 = vector.extract_strided_slice %6 {offsets = [0, 512], sizes = [16, 256], strides = [1, 1]} : vector<16x768xf32> to vector<16x256xf32>
    %10 = vector.extract_strided_slice %7 {offsets = [0, 0], sizes = [16, 128], strides = [1, 1]} : vector<16x256xf32> to vector<16x128xf32>
    %11 = arith.truncf %10 : vector<16x128xf32> to vector<16x128xbf16>
    %12 = vector.extract_strided_slice %8 {offsets = [0, 0], sizes = [16, 128], strides = [1, 1]} : vector<16x256xf32> to vector<16x128xf32>
    %13 = arith.truncf %12 : vector<16x128xf32> to vector<16x128xbf16>
    %14 = vector.extract_strided_slice %9 {offsets = [0, 0], sizes = [16, 128], strides = [1, 1]} : vector<16x256xf32> to vector<16x128xf32>
    %15 = arith.truncf %14 : vector<16x128xf32> to vector<16x128xbf16>
    %cst_6 = arith.constant dense<0.000000e+00> : vector<16x16xf32>
    %16 = tpu.matmul %11, %13, %cst_6 {dimension_numbers = #tpu.dot_dimension_numbers<[1], [1], [0], [0], [0, 0, 1, 0], [], []>} : vector<16x128xbf16>, vector<16x128xbf16>, vector<16x16xf32> -> vector<16x16xf32>
    %cst_7 = arith.constant dense<0xFF800000> : vector<16xf32>
    %17 = vector.multi_reduction <maximumf>, %16, %cst_7 [1] : vector<16x16xf32> to vector<16xf32>
    %18 = vector.shape_cast %17 : vector<16xf32> to vector<16x1xf32>
    %19 = vector.broadcast %18 : vector<16x1xf32> to vector<16x16xf32>
    %20 = arith.subf %16, %19 : vector<16x16xf32>
    %21 = math.exp %20 : vector<16x16xf32>
    %cst_8 = arith.constant dense<0.000000e+00> : vector<16xf32>
    %22 = vector.multi_reduction <add>, %21, %cst_8 [1] : vector<16x16xf32> to vector<16xf32>
    %23 = vector.shape_cast %22 : vector<16xf32> to vector<16x1xf32>
    %24 = vector.broadcast %23 : vector<16x1xf32> to vector<16x16xf32>
    %25 = arith.divf %21, %24 : vector<16x16xf32>
    %26 = arith.truncf %25 : vector<16x16xf32> to vector<16x16xbf16>
    %cst_9 = arith.constant dense<0.000000e+00> : vector<16x128xf32>
    %27 = tpu.matmul %26, %15, %cst_9 {dimension_numbers = #tpu.dot_dimension_numbers<[1], [0], [0], [1], [0, 0, 1, 1], [], []>} : vector<16x16xbf16>, vector<16x128xbf16>, vector<16x128xf32> -> vector<16x128xf32>
    %28 = vector.extract_strided_slice %7 {offsets = [0, 128], sizes = [16, 128], strides = [1, 1]} : vector<16x256xf32> to vector<16x128xf32>
    %29 = arith.truncf %28 : vector<16x128xf32> to vector<16x128xbf16>
    %30 = vector.extract_strided_slice %8 {offsets = [0, 128], sizes = [16, 128], strides = [1, 1]} : vector<16x256xf32> to vector<16x128xf32>
    %31 = arith.truncf %30 : vector<16x128xf32> to vector<16x128xbf16>
    %32 = vector.extract_strided_slice %9 {offsets = [0, 128], sizes = [16, 128], strides = [1, 1]} : vector<16x256xf32> to vector<16x128xf32>
    %33 = arith.truncf %32 : vector<16x128xf32> to vector<16x128xbf16>
    %cst_10 = arith.constant dense<0.000000e+00> : vector<16x16xf32>
    %34 = tpu.matmul %29, %31, %cst_10 {dimension_numbers = #tpu.dot_dimension_numbers<[1], [1], [0], [0], [0, 0, 1, 0], [], []>} : vector<16x128xbf16>, vector<16x128xbf16>, vector<16x16xf32> -> vector<16x16xf32>
    %cst_11 = arith.constant dense<0xFF800000> : vector<16xf32>
    %35 = vector.multi_reduction <maximumf>, %34, %cst_11 [1] : vector<16x16xf32> to vector<16xf32>
    %36 = vector.shape_cast %35 : vector<16xf32> to vector<16x1xf32>
    %37 = vector.broadcast %36 : vector<16x1xf32> to vector<16x16xf32>
    %38 = arith.subf %34, %37 : vector<16x16xf32>
    %39 = math.exp %38 : vector<16x16xf32>
    %cst_12 = arith.constant dense<0.000000e+00> : vector<16xf32>
    %40 = vector.multi_reduction <add>, %39, %cst_12 [1] : vector<16x16xf32> to vector<16xf32>
    %41 = vector.shape_cast %40 : vector<16xf32> to vector<16x1xf32>
    %42 = vector.broadcast %41 : vector<16x1xf32> to vector<16x16xf32>
    %43 = arith.divf %39, %42 : vector<16x16xf32>
    %44 = arith.truncf %43 : vector<16x16xf32> to vector<16x16xbf16>
    %cst_13 = arith.constant dense<0.000000e+00> : vector<16x128xf32>
    %45 = tpu.matmul %44, %33, %cst_13 {dimension_numbers = #tpu.dot_dimension_numbers<[1], [0], [0], [1], [0, 0, 1, 1], [], []>} : vector<16x16xbf16>, vector<16x128xbf16>, vector<16x128xf32> -> vector<16x128xf32>
    %46 = tpu.concatenate %27, %45 in 1 : vector<16x128xf32>, vector<16x128xf32> -> vector<16x256xf32>
    %47 = arith.truncf %46 : vector<16x256xf32> to vector<16x256xbf16>
    %c0_14 = arith.constant 0 : index
    %c0_15 = arith.constant 0 : index
    %48 = vector.load %arg4[%c0_14, %c0_15] : memref<256x256xbf16, #tpu.memory_space<vmem>>, vector<256x256xbf16>
    %cst_16 = arith.constant dense<0.000000e+00> : vector<16x256xf32>
    %49 = tpu.matmul %47, %48, %cst_16 {dimension_numbers = #tpu.dot_dimension_numbers<[1], [0], [0], [1], [0, 0, 1, 1], [], []>} : vector<16x256xbf16>, vector<256x256xbf16>, vector<16x256xf32> -> vector<16x256xf32>
    %c0_17 = arith.constant 0 : index
    %c0_18 = arith.constant 0 : index
    %50 = vector.load %arg5[%c0_17, %c0_18] : memref<1x256xf32, #tpu.memory_space<vmem>>, vector<1x256xf32>
    %51 = vector.broadcast %50 : vector<1x256xf32> to vector<16x256xf32>
    %52 = arith.addf %49, %51 : vector<16x256xf32>
    %c0_19 = arith.constant 0 : index
    %c0_20 = arith.constant 0 : index
    %c0_21 = arith.constant 0 : index
    %53 = vector.load %arg6[%c0_19, %c0_20, %c0_21] : memref<1x16x256xf32, #tpu.memory_space<vmem>>, vector<1x16x256xf32>
    %54 = vector.shape_cast %53 : vector<1x16x256xf32> to vector<16x256xf32>
    %55 = vector.shape_cast %52 : vector<16x256xf32> to vector<1x16x256xf32>
    tpu.vector_store %arg6[%c0_19, %c0_20, %c0_21], %55 {strides = array<i32>} : memref<1x16x256xf32, #tpu.memory_space<vmem>>, vector<1x16x256xf32>,
    return
  }
  func.func @transform_0(%arg0: i32) -> (i32, i32, i32) {
    %c0_i32 = arith.constant 0 : i32
    %c0_i32_0 = arith.constant 0 : i32
    %c0_i32_1 = arith.constant 0 : i32
    return %arg0, %c0_i32, %c0_i32_0 : i32, i32, i32
  }
  func.func @transform_1(%arg0: i32) -> (i32, i32) {
    %c0_i32 = arith.constant 0 : i32
    %c0_i32_0 = arith.constant 0 : i32
    %c0_i32_1 = arith.constant 0 : i32
    return %c0_i32, %c0_i32_0 : i32, i32
  }
  func.func @transform_2(%arg0: i32) -> (i32, i32) {
    %c0_i32 = arith.constant 0 : i32
    %c0_i32_0 = arith.constant 0 : i32
    %c0_i32_1 = arith.constant 0 : i32
    return %c0_i32, %c0_i32_0 : i32, i32
  }
  func.func @transform_3(%arg0: i32) -> (i32, i32) {
    %c0_i32 = arith.constant 0 : i32
    %c0_i32_0 = arith.constant 0 : i32
    %c0_i32_1 = arith.constant 0 : i32
    return %c0_i32, %c0_i32_0 : i32, i32
  }
  func.func @transform_4(%arg0: i32) -> (i32, i32) {
    %c0_i32 = arith.constant 0 : i32
    %c0_i32_0 = arith.constant 0 : i32
    %c0_i32_1 = arith.constant 0 : i32
    return %c0_i32, %c0_i32_0 : i32, i32
  }
  func.func @transform_5(%arg0: i32) -> (i32, i32, i32) {
    %c0_i32 = arith.constant 0 : i32
    %c0_i32_0 = arith.constant 0 : i32
    %c0_i32_1 = arith.constant 0 : i32
    return %arg0, %c0_i32, %c0_i32_0 : i32, i32, i32
  }
}

</mosaic_0001>

<llo_original>
// kernel: tpu_custom_call.1
$region0: #{tpu_custom_call.1}
  #allocation0 [shape = 'u32[]', space=smem, size = 0x4, offset = 0x4, fixed_abs, tag = 'smem constant byte address 0x4 - core index']
  #allocation1 [shape = 'u32[144,128]{1,0:T(1,128)}', space=vmem, size = 0x12000, scoped, tag = 'internal scratch']
  %s0 = inlined_call_operand.hbm [shape: bf16[2,16,256], index: 0, kind: input, shape index: {}]
  %s1 = inlined_call_operand.hbm [shape: bf16[256,768], index: 1, kind: input, shape index: {}]
  %s2 = inlined_call_operand.vmem [shape: f32[1,768], index: 2, kind: input, shape index: {}]
  %s3 = inlined_call_operand.hbm [shape: bf16[256,256], index: 3, kind: input, shape index: {}]
  %s4 = inlined_call_operand.vmem [shape: f32[1,256], index: 4, kind: input, shape index: {}]
  %s5 = inlined_call_operand.hbm [shape: f32[2,16,256], index: 5, kind: output, shape index: {}]
  %s6 = sld [smem:[#allocation0]]
  $region65: #{tpu_custom_call.1} parent=0
    _
  %s8 = ssub.s32 1, %s6
  %s9 = scalar_select 0, %s8, %s6
  $region1: #{tpu_custom_call.1} parent=0
    #allocation2 [shape = 'u8[16384]{0}', space=vmem, size = 0x4000, scoped, tag = 'input window, operand 0']
    #allocation3 [shape = 's32[2]{0}', space=sflag, size = 0x8, scoped, tag = 'scoped memory for tpu_custom_call.1']
    #allocation4 [shape = 's32[2]{0}', space=sflag, size = 0x8, scoped, tag = 'scoped memory for tpu_custom_call.1']
    #allocation5 [shape = 'u8[393216]{0}', space=vmem, size = 0x60000, scoped, tag = 'input window, operand 1, single buffered']
    #allocation6 [shape = 's32[1]{0}', space=sflag, size = 0x4, scoped, tag = 'scoped memory for tpu_custom_call.1']
    #allocation7 [shape = 'u8[131072]{0}', space=vmem, size = 0x20000, scoped, tag = 'input window, operand 3, single buffered']
    #allocation8 [shape = 'u8[32768]{0}', space=vmem, size = 0x8000, scoped, tag = 'output window, operand 0']
    %10 = vsyncpa [#allocation3], 0
    %s11 = scalar_lea.sflag [#allocation3], 1
    %12 = vsyncpa %s11, 0
    %13 = vsyncpa [#allocation6], 0
    %14 = vsyncpa [#allocation4], 0
    %s15 = scalar_lea.sflag [#allocation4], 1
    %16 = vsyncpa %s15, 0
    loop: start=0, step=1, limit=4
    $region2: #{tpu_custom_call.1} parent=1 // loop_pre_header
      _
    $region3: #{tpu_custom_call.1} parent=1 // loop_header
      %s18 = sphi 0, %s22
      %p19 = scmp.ge.s32.totalorder %s18, 4
      %s28 = sphi 0, %s30
      %s31 = sphi 0, %s28
      %s32 = sphi 0, %s31
      %s48 = sphi 0, %s32
      %s52 = sphi 0, %s52
      %s54 = sphi 0, %s52
      %s55 = sphi 0, %s54
      %s69 = sphi 0, %s55
      %s73 = sphi 0, %s73
      %s75 = sphi 0, %s73
      %s76 = sphi 0, %s75
      %s90 = sphi 0, %s76
      %s94 = sphi 0, %s94
      %s96 = sphi 0, %s94
      %s97 = sphi 0, %s96
      %s111 = sphi 0, %s97
      %s115 = sphi 0, %s115
      %s117 = sphi 0, %s115
      %s118 = sphi 0, %s117
      %s132 = sphi 0, %s118
      %s138 = sphi 0, %s140
      %s141 = sphi 0, %s138
      %s142 = sphi 0, %s141
      %s158 = sphi 0, %s142
    $region4: #{tpu_custom_call.1} parent=1 // loop_header_branch
      %21 = sbr.rel (%p19) target = $region8
    $region5: #{tpu_custom_call.1} parent=1 // loop_body
      %s23 = ssub.s32 %s18, 1
      %s24 = ssub.s32 %s18, 2
      %s25 = sadd.s32 %s18, 1
      %s26 = ssub.s32 %s18, %s25
      %p27 = scmp.eq.s32.totalorder %s26, 0
      %s29 = sadd.s32 %s28, 1
      %s30 = scalar_select %p27, %s28, %s29
      %p33 = pneg %p27
      %p34 = scmp.eq.s32.totalorder %s18, 1
      %p35 = por %p33, %p34
      %p36 = scmp.ne.s32.totalorder %s28, %s31
      %p37 = scmp.eq.s32.totalorder %s18, 0
      %p38 = por %p36, %p37
      %p39 = scmp.ne.s32.totalorder %s28, %s31
      %p40 = scmp.eq.s32.totalorder %s23, 1
      %p41 = por %p39, %p40
      %p42 = scmp.ne.s32.totalorder %s31, %s32
      %p43 = scmp.eq.s32.totalorder %s23, 0
      %p44 = por %p42, %p43
      %p45 = scmp.ne.s32.totalorder %s31, %s32
      %p46 = scmp.eq.s32.totalorder %s24, 1
      %p47 = por %p45, %p46
      %p49 = scmp.ne.s32.totalorder %s32, %s48
      %p50 = scmp.eq.s32.totalorder %s24, 0
      %p51 = por %p49, %p50
      %s53 = sadd.s32 %s52, 1
      %p56 = scmp.eq.s32.totalorder %s18, 1
      %p57 = scmp.ne.s32.totalorder %s52, %s54
      %p58 = scmp.eq.s32.totalorder %s18, 0
      %p59 = por %p57, %p58
      %p60 = scmp.ne.s32.totalorder %s52, %s54
      %p61 = scmp.eq.s32.totalorder %s23, 1
      %p62 = por %p60, %p61
      %p63 = scmp.ne.s32.totalorder %s54, %s55
      %p64 = scmp.eq.s32.totalorder %s23, 0
      %p65 = por %p63, %p64
      %p66 = scmp.ne.s32.totalorder %s54, %s55
      %p67 = scmp.eq.s32.totalorder %s24, 1
      %p68 = por %p66, %p67
      %p70 = scmp.ne.s32.totalorder %s55, %s69
      %p71 = scmp.eq.s32.totalorder %s24, 0
      %p72 = por %p70, %p71
      %s74 = sadd.s32 %s73, 1
      %p77 = scmp.eq.s32.totalorder %s18, 1
      %p78 = scmp.ne.s32.totalorder %s73, %s75
      %p79 = scmp.eq.s32.totalorder %s18, 0
      %p80 = por %p78, %p79
      %p81 = scmp.ne.s32.totalorder %s73, %s75
      %p82 = scmp.eq.s32.totalorder %s23, 1
      %p83 = por %p81, %p82
      %p84 = scmp.ne.s32.totalorder %s75, %s76
      %p85 = scmp.eq.s32.totalorder %s23, 0
      %p86 = por %p84, %p85
      %p87 = scmp.ne.s32.totalorder %s75, %s76
      %p88 = scmp.eq.s32.totalorder %s24, 1
      %p89 = por %p87, %p88
      %p91 = scmp.ne.s32.totalorder %s76, %s90
      %p92 = scmp.eq.s32.totalorder %s24, 0
      %p93 = por %p91, %p92
      %s95 = sadd.s32 %s94, 1
      %p98 = scmp.eq.s32.totalorder %s18, 1
      %p99 = scmp.ne.s32.totalorder %s94, %s96
      %p100 = scmp.eq.s32.totalorder %s18, 0
      %p101 = por %p99, %p100
      %p102 = scmp.ne.s32.totalorder %s94, %s96
      %p103 = scmp.eq.s32.totalorder %s23, 1
      %p104 = por %p102, %p103
      %p105 = scmp.ne.s32.totalorder %s96, %s97
      %p106 = scmp.eq.s32.totalorder %s23, 0
      %p107 = por %p105, %p106
      %p108 = scmp.ne.s32.totalorder %s96, %s97
      %p109 = scmp.eq.s32.totalorder %s24, 1
      %p110 = por %p108, %p109
      %p112 = scmp.ne.s32.totalorder %s97, %s111
      %p113 = scmp.eq.s32.totalorder %s24, 0
      %p114 = por %p112, %p113
      %s116 = sadd.s32 %s115, 1
      %p119 = scmp.eq.s32.totalorder %s18, 1
      %p120 = scmp.ne.s32.totalorder %s115, %s117
      %p121 = scmp.eq.s32.totalorder %s18, 0
      %p122 = por %p120, %p121
      %p123 = scmp.ne.s32.totalorder %s115, %s117
      %p124 = scmp.eq.s32.totalorder %s23, 1
      %p125 = por %p123, %p124
      %p126 = scmp.ne.s32.totalorder %s117, %s118
      %p127 = scmp.eq.s32.totalorder %s23, 0
      %p128 = por %p126, %p127
      %p129 = scmp.ne.s32.totalorder %s117, %s118
      %p130 = scmp.eq.s32.totalorder %s24, 1
      %p131 = por %p129, %p130
      %p133 = scmp.ne.s32.totalorder %s118, %s132
      %p134 = scmp.eq.s32.totalorder %s24, 0
      %p135 = por %p133, %p134
      %s136 = ssub.s32 %s18, %s25
      %p137 = scmp.eq.s32.totalorder %s136, 0
      %s139 = sadd.s32 %s138, 1
      %s140 = scalar_select %p137, %s138, %s139
      %p143 = pneg %p137
      %p144 = scmp.eq.s32.totalorder %s18, 1
      %p145 = por %p143, %p144
      %p146 = scmp.ne.s32.totalorder %s138, %s141
      %p147 = scmp.eq.s32.totalorder %s18, 0
      %p148 = por %p146, %p147
      %p149 = scmp.ne.s32.totalorder %s138, %s141
      %p150 = scmp.eq.s32.totalorder %s23, 1
      %p151 = por %p149, %p150
      %p152 = scmp.ne.s32.totalorder %s141, %s142
      %p153 = scmp.eq.s32.totalorder %s23, 0
      %p154 = por %p152, %p153
      %p155 = scmp.ne.s32.totalorder %s141, %s142
      %p156 = scmp.eq.s32.totalorder %s24, 1
      %p157 = por %p155, %p156
      %p159 = scmp.ne.s32.totalorder %s142, %s158
      %p160 = scmp.eq.s32.totalorder %s24, 0
      %p161 = por %p159, %p160
      %p162 = scmp.le.s32.totalorder 1, %s18
      %p163 = scmp.lt.s32.totalorder %s18, 3
      %p164 = pnand %p162, %p163
      %p165 = pneg %p164
      // Predicated region
      $region9: #{tpu_custom_call.1} parent=5 // pred_check
        _
      $region10: #{tpu_custom_call.1} parent=5 // pred_check_branch
        %167 = sbr.rel (%p164) target = $region12
      $region11: #{tpu_custom_call.1} parent=5 // pred_region
        %s168 = ssub.s32 %s18, 1
        // Predicated region
        $region13: #{tpu_custom_call.1} parent=11 // pred_check
          %p169 = pneg %p65
        $region14: #{tpu_custom_call.1} parent=11 // pred_check_branch
          %171 = sbr.rel (%p169) target = $region16
        $region15: #{tpu_custom_call.1} parent=11 // pred_region
          %s173 = ssub.s32 12288, 12288
          %174 = vsyncadd [#allocation6], %s173
          %s175 = sshll.u32 [#allocation5], 4
          %s176 = int_to_ptr.vmem [resolvable:$true] %s175
          %181 = dma.hbm_to_vmem [thread:$0]  %s1, 12288, %s176, [#allocation6], 384, 384, 24
        $region16: #{tpu_custom_call.1} parent=11 // pred_fallthru
          _
        // Predicated region
        $region17: #{tpu_custom_call.1} parent=11 // pred_check
          %p182 = pneg %p86
        $region18: #{tpu_custom_call.1} parent=11 // pred_check_branch
          %184 = sbr.rel (%p182) target = $region20
        $region19: #{tpu_custom_call.1} parent=11 // pred_region
          _
        $region20: #{tpu_custom_call.1} parent=11 // pred_fallthru
          _
        // Predicated region
        $region21: #{tpu_custom_call.1} parent=11 // pred_check
          %p185 = pneg %p107
        $region22: #{tpu_custom_call.1} parent=11 // pred_check_branch
          %187 = sbr.rel (%p185) target = $region24
        $region23: #{tpu_custom_call.1} parent=11 // pred_region
          %s189 = ssub.s32 4096, 4096
          %190 = vsyncadd [#allocation6], %s189
          %s191 = sshll.u32 [#allocation7], 4
          %s192 = int_to_ptr.vmem [resolvable:$true] %s191
          %197 = dma.hbm_to_vmem [thread:$0]  %s3, 4096, %s192, [#allocation6], 128, 128, 8
        $region24: #{tpu_custom_call.1} parent=11 // pred_fallthru
          _
        // Predicated region
        $region25: #{tpu_custom_call.1} parent=11 // pred_check
          %p198 = pneg %p128
        $region26: #{tpu_custom_call.1} parent=11 // pred_check_branch
          %200 = sbr.rel (%p198) target = $region28
        $region27: #{tpu_custom_call.1} parent=11 // pred_region
          _
        $region28: #{tpu_custom_call.1} parent=11 // pred_fallthru
          _
      $region12: #{tpu_custom_call.1} parent=5 // pred_fallthru
        _
      %p201 = scmp.lt.s32.totalorder %s18, 2
      // Predicated region
      $region29: #{tpu_custom_call.1} parent=5 // pred_check
        %p202 = pneg %p201
      $region30: #{tpu_custom_call.1} parent=5 // pred_check_branch
        %204 = sbr.rel (%p202) target = $region32
      $region31: #{tpu_custom_call.1} parent=5 // pred_region
        // Predicated region
        $region33: #{tpu_custom_call.1} parent=31 // pred_check
          %p205 = pneg %p38
        $region34: #{tpu_custom_call.1} parent=31 // pred_check_branch
          %207 = sbr.rel (%p205) target = $region36
        $region35: #{tpu_custom_call.1} parent=31 // pred_region
          %s208 = sand.u32 %s28, 1
          %s209 = scalar_lea.sflag [#allocation3], %s208
          %s210 = sand.u32 %s28, 1
          %s211 = smul.addr %s210, 16
          %s212 = scalar_lea.vmem [#allocation2], %s211
          %s214 = ssub.s32 256, 256
          %215 = vsyncadd %s209, %s214
          %s216 = smul.addr %s18, 4
          %s217 = smul.addr %s216, 64
          %s218 = scalar_lea.hbm %s0, %s217
          %s219 = sshll.u32 %s212, 4
          %s220 = int_to_ptr.vmem [resolvable:$true] %s219
          %225 = dma.hbm_to_vmem [thread:$0]  %s218, 256, %s220, %s209, 128, 128, 8
        $region36: #{tpu_custom_call.1} parent=31 // pred_fallthru
          _
      $region32: #{tpu_custom_call.1} parent=5 // pred_fallthru
        _
      %p226 = scmp.le.s32.totalorder 1, %s18
      %p227 = scmp.lt.s32.totalorder %s18, 3
      %p228 = pnand %p226, %p227
      %p229 = pneg %p228
      // Predicated region
      $region37: #{tpu_custom_call.1} parent=5 // pred_check
        _
      $region38: #{tpu_custom_call.1} parent=5 // pred_check_branch
        %231 = sbr.rel (%p228) target = $region40
      $region39: #{tpu_custom_call.1} parent=5 // pred_region
        %s232 = ssub.s32 %s18, 1
        %s233 = sand.u32 %s31, 1
        %s234 = scalar_lea.sflag [#allocation3], %s233
        %s235 = sand.u32 %s31, 1
        %s236 = smul.addr %s235, 16
        %s237 = scalar_lea.vmem [#allocation2], %s236
        // Predicated region
        $region41: #{tpu_custom_call.1} parent=39 // pred_check
          %p238 = pneg %p44
        $region42: #{tpu_custom_call.1} parent=39 // pred_check_branch
          %240 = sbr.rel (%p238) target = $region44
        $region43: #{tpu_custom_call.1} parent=39 // pred_region
          %241 = dma.done %s234, 256
        $region44: #{tpu_custom_call.1} parent=39 // pred_fallthru
          _
        // Predicated region
        $region45: #{tpu_custom_call.1} parent=39 // pred_check
          %p242 = pneg %p65
        $region46: #{tpu_custom_call.1} parent=39 // pred_check_branch
          %244 = sbr.rel (%p242) target = $region48
        $region47: #{tpu_custom_call.1} parent=39 // pred_region
          %245 = dma.done [#allocation6], 12288
        $region48: #{tpu_custom_call.1} parent=39 // pred_fallthru
          _
        // Predicated region
        $region49: #{tpu_custom_call.1} parent=39 // pred_check
          %p246 = pneg %p107
        $region50: #{tpu_custom_call.1} parent=39 // pred_check_branch
          %248 = sbr.rel (%p246) target = $region52
        $region51: #{tpu_custom_call.1} parent=39 // pred_region
          %249 = dma.done [#allocation6], 4096
        $region52: #{tpu_custom_call.1} parent=39 // pred_fallthru
          _
        %s250 = sand.u32 %s31, 1
        %s251 = scalar_lea.sflag [#allocation3], %s250
        %s252 = sand.u32 %s31, 1
        %s253 = smul.addr %s252, 16
        %s254 = scalar_lea.vmem [#allocation2], %s253
        %p255 = pneg %p44
        %p256 = pneg %p41
        %p257 = pneg %p65
        %p258 = pneg %p62
        %p259 = pneg %p86
        %p260 = pneg %p83
        %p261 = pneg %p107
        %p262 = pneg %p104
        %p263 = pneg %p128
        %p264 = pneg %p125
        %p265 = pneg %p154
        %p266 = pneg %p151
        %s267 = sand.u32 %s141, 1
        %s268 = scalar_lea.sflag [#allocation4], %s267
        %s269 = sand.u32 %s141, 1
        %s270 = smul.addr %s269, 32
        %s271 = scalar_lea.vmem [#allocation8], %s270
        %v273 = vld [vmem:[%s237] sm:$0xff]
        %v274 = vld [vmem:[%s237 + $0x8] sm:$0xff]
        %v275 = vld [vmem:[#allocation5] sm:$0xff]
        %v276 = vld [vmem:[#allocation5 + $0x8] sm:$0xff]
        %v277 = vld [vmem:[#allocation5 + $0x10] sm:$0xff]
        %v278 = vld [vmem:[#allocation5 + $0x18] sm:$0xff]
        %v279 = vld [vmem:[#allocation5 + $0x20] sm:$0xff]
        %v280 = vld [vmem:[#allocation5 + $0x28] sm:$0xff]
        %v281 = vld [vmem:[#allocation5 + $0x30] sm:$0xff]
        %v282 = vld [vmem:[#allocation5 + $0x38] sm:$0xff]
        %v283 = vld [vmem:[#allocation5 + $0x40] sm:$0xff]
        %v284 = vld [vmem:[#allocation5 + $0x48] sm:$0xff]
        %v285 = vld [vmem:[#allocation5 + $0x50] sm:$0xff]
        %v286 = vld [vmem:[#allocation5 + $0x58] sm:$0xff]
        %v287 = vld [vmem:[#allocation5 + $0x60] sm:$0xff]
        %v288 = vld [vmem:[#allocation5 + $0x68] sm:$0xff]
        %v289 = vld [vmem:[#allocation5 + $0x70] sm:$0xff]
        %v290 = vld [vmem:[#allocation5 + $0x78] sm:$0xff]
        %v291 = vld [vmem:[#allocation5 + $0x80] sm:$0xff]
        %v292 = vld [vmem:[#allocation5 + $0x88] sm:$0xff]
        %v293 = vld [vmem:[#allocation5 + $0x90] sm:$0xff]
        %v294 = vld [vmem:[#allocation5 + $0x98] sm:$0xff]
        %v295 = vld [vmem:[#allocation5 + $0xa0] sm:$0xff]
        %v296 = vld [vmem:[#allocation5 + $0xa8] sm:$0xff]
        %v297 = vld [vmem:[#allocation5 + $0xb0] sm:$0xff]
        %v298 = vld [vmem:[#allocation5 + $0xb8] sm:$0xff]
        %v299 = vld [vmem:[#allocation5 + $0xc0] sm:$0xff]
        %v300 = vld [vmem:[#allocation5 + $0xc8] sm:$0xff]
        %v301 = vld [vmem:[#allocation5 + $0xd0] sm:$0xff]
        %v302 = vld [vmem:[#allocation5 + $0xd8] sm:$0xff]
        %v303 = vld [vmem:[#allocation5 + $0xe0] sm:$0xff]
        %v304 = vld [vmem:[#allocation5 + $0xe8] sm:$0xff]
        %v305 = vld [vmem:[#allocation5 + $0xf0] sm:$0xff]
        %v306 = vld [vmem:[#allocation5 + $0xf8] sm:$0xff]
        %v307 = vld [vmem:[#allocation5 + $0x100] sm:$0xff]
        %v308 = vld [vmem:[#allocation5 + $0x108] sm:$0xff]
        %v309 = vld [vmem:[#allocation5 + $0x110] sm:$0xff]
        %v310 = vld [vmem:[#allocation5 + $0x118] sm:$0xff]
        %v311 = vld [vmem:[#allocation5 + $0x120] sm:$0xff]
        %v312 = vld [vmem:[#allocation5 + $0x128] sm:$0xff]
        %v313 = vld [vmem:[#allocation5 + $0x130] sm:$0xff]
        %v314 = vld [vmem:[#allocation5 + $0x138] sm:$0xff]
        %v315 = vld [vmem:[#allocation5 + $0x140] sm:$0xff]
        %v316 = vld [vmem:[#allocation5 + $0x148] sm:$0xff]
        %v317 = vld [vmem:[#allocation5 + $0x150] sm:$0xff]
        %v318 = vld [vmem:[#allocation5 + $0x158] sm:$0xff]
        %v319 = vld [vmem:[#allocation5 + $0x160] sm:$0xff]
        %v320 = vld [vmem:[#allocation5 + $0x168] sm:$0xff]
        %v321 = vld [vmem:[#allocation5 + $0x170] sm:$0xff]
        %v322 = vld [vmem:[#allocation5 + $0x178] sm:$0xff]
        %v323 = vld [vmem:[#allocation5 + $0x180] sm:$0xff]
        %v324 = vld [vmem:[#allocation5 + $0x188] sm:$0xff]
        %v325 = vld [vmem:[#allocation5 + $0x190] sm:$0xff]
        %v326 = vld [vmem:[#allocation5 + $0x198] sm:$0xff]
        %v327 = vld [vmem:[#allocation5 + $0x1a0] sm:$0xff]
        %v328 = vld [vmem:[#allocation5 + $0x1a8] sm:$0xff]
        %v329 = vld [vmem:[#allocation5 + $0x1b0] sm:$0xff]
        %v330 = vld [vmem:[#allocation5 + $0x1b8] sm:$0xff]
        %v331 = vld [vmem:[#allocation5 + $0x1c0] sm:$0xff]
        %v332 = vld [vmem:[#allocation5 + $0x1c8] sm:$0xff]
        %v333 = vld [vmem:[#allocation5 + $0x1d0] sm:$0xff]
        %v334 = vld [vmem:[#allocation5 + $0x1d8] sm:$0xff]
        %v335 = vld [vmem:[#allocation5 + $0x1e0] sm:$0xff]
        %v336 = vld [vmem:[#allocation5 + $0x1e8] sm:$0xff]
        %v337 = vld [vmem:[#allocation5 + $0x1f0] sm:$0xff]
        %v338 = vld [vmem:[#allocation5 + $0x1f8] sm:$0xff]
        %v339 = vld [vmem:[#allocation5 + $0x200] sm:$0xff]
        %v340 = vld [vmem:[#allocation5 + $0x208] sm:$0xff]
        %v341 = vld [vmem:[#allocation5 + $0x210] sm:$0xff]
        %v342 = vld [vmem:[#allocation5 + $0x218] sm:$0xff]
        %v343 = vld [vmem:[#allocation5 + $0x220] sm:$0xff]
        %v344 = vld [vmem:[#allocation5 + $0x228] sm:$0xff]
        %v345 = vld [vmem:[#allocation5 + $0x230] sm:$0xff]
        %v346 = vld [vmem:[#allocation5 + $0x238] sm:$0xff]
        %v347 = vld [vmem:[#allocation5 + $0x240] sm:$0xff]
        %v348 = vld [vmem:[#allocation5 + $0x248] sm:$0xff]
        %v349 = vld [vmem:[#allocation5 + $0x250] sm:$0xff]
        %v350 = vld [vmem:[#allocation5 + $0x258] sm:$0xff]
        %v351 = vld [vmem:[#allocation5 + $0x260] sm:$0xff]
        %v352 = vld [vmem:[#allocation5 + $0x268] sm:$0xff]
        %v353 = vld [vmem:[#allocation5 + $0x270] sm:$0xff]
        %v354 = vld [vmem:[#allocation5 + $0x278] sm:$0xff]
        %v355 = vld [vmem:[#allocation5 + $0x280] sm:$0xff]
        %v356 = vld [vmem:[#allocation5 + $0x288] sm:$0xff]
        %v357 = vld [vmem:[#allocation5 + $0x290] sm:$0xff]
        %v358 = vld [vmem:[#allocation5 + $0x298] sm:$0xff]
        %v359 = vld [vmem:[#allocation5 + $0x2a0] sm:$0xff]
        %v360 = vld [vmem:[#allocation5 + $0x2a8] sm:$0xff]
        %v361 = vld [vmem:[#allocation5 + $0x2b0] sm:$0xff]
        %v362 = vld [vmem:[#allocation5 + $0x2b8] sm:$0xff]
        %v363 = vld [vmem:[#allocation5 + $0x2c0] sm:$0xff]
        %v364 = vld [vmem:[#allocation5 + $0x2c8] sm:$0xff]
        %v365 = vld [vmem:[#allocation5 + $0x2d0] sm:$0xff]
        %v366 = vld [vmem:[#allocation5 + $0x2d8] sm:$0xff]
        %v367 = vld [vmem:[#allocation5 + $0x2e0] sm:$0xff]
        %v368 = vld [vmem:[#allocation5 + $0x2e8] sm:$0xff]
        %v369 = vld [vmem:[#allocation5 + $0x2f0] sm:$0xff]
        %v370 = vld [vmem:[#allocation5 + $0x2f8] sm:$0xff]
        %v371 = vld [vmem:[%s2] sm:$0x3f]
        %v373 = vlaneseq
        %v374 = vshrl.u32 %v373, 7
        %v375 = vsub.s32 0, %v374
        %v376 = vrot.slane %v371, %v375
        %v377 = vlaneseq
        %v378 = vshrl.u32 %v377, 7
        %v379 = vsub.s32 1, %v378
        %v380 = vrot.slane %v371, %v379
        %v381 = vlaneseq
        %v382 = vshrl.u32 %v381, 7
        %v383 = vsub.s32 2, %v382
        %v384 = vrot.slane %v371, %v383
        %v385 = vlaneseq
        %v386 = vshrl.u32 %v385, 7
        %v387 = vsub.s32 3, %v386
        %v388 = vrot.slane %v371, %v387
        %v389 = vlaneseq
        %v390 = vshrl.u32 %v389, 7
        %v391 = vsub.s32 4, %v390
        %v392 = vrot.slane %v371, %v391
        %v393 = vlaneseq
        %v394 = vshrl.u32 %v393, 7
        %v395 = vsub.s32 5, %v394
        %v396 = vrot.slane %v371, %v395
        %v405 = vunpack.c.l.b16 %v273
        %v406 = vunpack.c.h.b16 %v273
        %v407 = vunpack.c.l.b16 %v274
        %v408 = vunpack.c.h.b16 %v274
        %v409 = vpack.c.b16 %v407, %v405
        %v410 = vpack.c.b16 %v408, %v406
        %v509 = vunpack.c.l.b16 %v275
        %v510 = vunpack.c.h.b16 %v275
        %v511 = vunpack.c.l.b16 %v276
        %v512 = vunpack.c.h.b16 %v276
        %v513 = vunpack.c.l.b16 %v277
        %v514 = vunpack.c.h.b16 %v277
        %v515 = vunpack.c.l.b16 %v278
        %v516 = vunpack.c.h.b16 %v278
        %v517 = vunpack.c.l.b16 %v279
        %v518 = vunpack.c.h.b16 %v279
        %v519 = vunpack.c.l.b16 %v280
        %v520 = vunpack.c.h.b16 %v280
        %v521 = vunpack.c.l.b16 %v281
        %v522 = vunpack.c.h.b16 %v281
        %v523 = vunpack.c.l.b16 %v282
        %v524 = vunpack.c.h.b16 %v282
        %v525 = vunpack.c.l.b16 %v283
        %v526 = vunpack.c.h.b16 %v283
        %v527 = vunpack.c.l.b16 %v284
        %v528 = vunpack.c.h.b16 %v284
        %v529 = vunpack.c.l.b16 %v285
        %v530 = vunpack.c.h.b16 %v285
        %v531 = vunpack.c.l.b16 %v286
        %v532 = vunpack.c.h.b16 %v286
        %v533 = vunpack.c.l.b16 %v287
        %v534 = vunpack.c.h.b16 %v287
        %v535 = vunpack.c.l.b16 %v288
        %v536 = vunpack.c.h.b16 %v288
        %v537 = vunpack.c.l.b16 %v289
        %v538 = vunpack.c.h.b16 %v289
        %v539 = vunpack.c.l.b16 %v290
        %v540 = vunpack.c.h.b16 %v290
        %v541 = vunpack.c.l.b16 %v291
        %v542 = vunpack.c.h.b16 %v291
        %v543 = vunpack.c.l.b16 %v292
        %v544 = vunpack.c.h.b16 %v292
        %v545 = vunpack.c.l.b16 %v293
        %v546 = vunpack.c.h.b16 %v293
        %v547 = vunpack.c.l.b16 %v294
        %v548 = vunpack.c.h.b16 %v294
        %v549 = vunpack.c.l.b16 %v295
        %v550 = vunpack.c.h.b16 %v295
        %v551 = vunpack.c.l.b16 %v296
        %v552 = vunpack.c.h.b16 %v296
        %v553 = vunpack.c.l.b16 %v297
        %v554 = vunpack.c.h.b16 %v297
        %v555 = vunpack.c.l.b16 %v298
        %v556 = vunpack.c.h.b16 %v298
        %v557 = vunpack.c.l.b16 %v299
        %v558 = vunpack.c.h.b16 %v299
        %v559 = vunpack.c.l.b16 %v300
        %v560 = vunpack.c.h.b16 %v300
        %v561 = vunpack.c.l.b16 %v301
        %v562 = vunpack.c.h.b16 %v301
        %v563 = vunpack.c.l.b16 %v302
        %v564 = vunpack.c.h.b16 %v302
        %v565 = vunpack.c.l.b16 %v303
        %v566 = vunpack.c.h.b16 %v303
        %v567 = vunpack.c.l.b16 %v304
        %v568 = vunpack.c.h.b16 %v304
        %v569 = vunpack.c.l.b16 %v305
        %v570 = vunpack.c.h.b16 %v305
        %v571 = vunpack.c.l.b16 %v306
        %v572 = vunpack.c.h.b16 %v306
        %v573 = vunpack.c.l.b16 %v307
        %v574 = vunpack.c.h.b16 %v307
        %v575 = vunpack.c.l.b16 %v308
        %v576 = vunpack.c.h.b16 %v308
        %v577 = vunpack.c.l.b16 %v309
        %v578 = vunpack.c.h.b16 %v309
        %v579 = vunpack.c.l.b16 %v310
        %v580 = vunpack.c.h.b16 %v310
        %v581 = vunpack.c.l.b16 %v311
        %v582 = vunpack.c.h.b16 %v311
        %v583 = vunpack.c.l.b16 %v312
        %v584 = vunpack.c.h.b16 %v312
        %v585 = vunpack.c.l.b16 %v313
        %v586 = vunpack.c.h.b16 %v313
        %v587 = vunpack.c.l.b16 %v314
        %v588 = vunpack.c.h.b16 %v314
        %v589 = vunpack.c.l.b16 %v315
        %v590 = vunpack.c.h.b16 %v315
        %v591 = vunpack.c.l.b16 %v316
        %v592 = vunpack.c.h.b16 %v316
        %v593 = vunpack.c.l.b16 %v317
        %v594 = vunpack.c.h.b16 %v317
        %v595 = vunpack.c.l.b16 %v318
        %v596 = vunpack.c.h.b16 %v318
        %v597 = vunpack.c.l.b16 %v319
        %v598 = vunpack.c.h.b16 %v319
        %v599 = vunpack.c.l.b16 %v320
        %v600 = vunpack.c.h.b16 %v320
        %v601 = vunpack.c.l.b16 %v321
        %v602 = vunpack.c.h.b16 %v321
        %v603 = vunpack.c.l.b16 %v322
        %v604 = vunpack.c.h.b16 %v322
        %v605 = vunpack.c.l.b16 %v323
        %v606 = vunpack.c.h.b16 %v323
        %v607 = vunpack.c.l.b16 %v324
        %v608 = vunpack.c.h.b16 %v324
        %v609 = vunpack.c.l.b16 %v325
        %v610 = vunpack.c.h.b16 %v325
        %v611 = vunpack.c.l.b16 %v326
        %v612 = vunpack.c.h.b16 %v326
        %v613 = vunpack.c.l.b16 %v327
        %v614 = vunpack.c.h.b16 %v327
        %v615 = vunpack.c.l.b16 %v328
        %v616 = vunpack.c.h.b16 %v328
        %v617 = vunpack.c.l.b16 %v329
        %v618 = vunpack.c.h.b16 %v329
        %v619 = vunpack.c.l.b16 %v330
        %v620 = vunpack.c.h.b16 %v330
        %v621 = vunpack.c.l.b16 %v331
        %v622 = vunpack.c.h.b16 %v331
        %v623 = vunpack.c.l.b16 %v332
        %v624 = vunpack.c.h.b16 %v332
        %v625 = vunpack.c.l.b16 %v333
        %v626 = vunpack.c.h.b16 %v333
        %v627 = vunpack.c.l.b16 %v334
        %v628 = vunpack.c.h.b16 %v334
        %v629 = vunpack.c.l.b16 %v335
        %v630 = vunpack.c.h.b16 %v335
        %v631 = vunpack.c.l.b16 %v336
        %v632 = vunpack.c.h.b16 %v336
        %v633 = vunpack.c.l.b16 %v337
        %v634 = vunpack.c.h.b16 %v337
        %v635 = vunpack.c.l.b16 %v338
        %v636 = vunpack.c.h.b16 %v338
        %v637 = vunpack.c.l.b16 %v339
        %v638 = vunpack.c.h.b16 %v339
        %v639 = vunpack.c.l.b16 %v340
        %v640 = vunpack.c.h.b16 %v340
        %v641 = vunpack.c.l.b16 %v341
        %v642 = vunpack.c.h.b16 %v341
        %v643 = vunpack.c.l.b16 %v342
        %v644 = vunpack.c.h.b16 %v342
        %v645 = vunpack.c.l.b16 %v343
        %v646 = vunpack.c.h.b16 %v343
        %v647 = vunpack.c.l.b16 %v344
        %v648 = vunpack.c.h.b16 %v344
        %v649 = vunpack.c.l.b16 %v345
        %v650 = vunpack.c.h.b16 %v345
        %v651 = vunpack.c.l.b16 %v346
        %v652 = vunpack.c.h.b16 %v346
        %v653 = vunpack.c.l.b16 %v347
        %v654 = vunpack.c.h.b16 %v347
        %v655 = vunpack.c.l.b16 %v348
        %v656 = vunpack.c.h.b16 %v348
        %v657 = vunpack.c.l.b16 %v349
        %v658 = vunpack.c.h.b16 %v349
        %v659 = vunpack.c.l.b16 %v350
        %v660 = vunpack.c.h.b16 %v350
        %v661 = vunpack.c.l.b16 %v351
        %v662 = vunpack.c.h.b16 %v351
        %v663 = vunpack.c.l.b16 %v352
        %v664 = vunpack.c.h.b16 %v352
        %v665 = vunpack.c.l.b16 %v353
        %v666 = vunpack.c.h.b16 %v353
        %v667 = vunpack.c.l.b16 %v354
        %v668 = vunpack.c.h.b16 %v354
        %v669 = vunpack.c.l.b16 %v355
        %v670 = vunpack.c.h.b16 %v355
        %v671 = vunpack.c.l.b16 %v356
        %v672 = vunpack.c.h.b16 %v356
        %v673 = vunpack.c.l.b16 %v357
        %v674 = vunpack.c.h.b16 %v357
        %v675 = vunpack.c.l.b16 %v358
        %v676 = vunpack.c.h.b16 %v358
        %v677 = vunpack.c.l.b16 %v359
        %v678 = vunpack.c.h.b16 %v359
        %v679 = vunpack.c.l.b16 %v360
        %v680 = vunpack.c.h.b16 %v360
        %v681 = vunpack.c.l.b16 %v361
        %v682 = vunpack.c.h.b16 %v361
        %v683 = vunpack.c.l.b16 %v362
        %v684 = vunpack.c.h.b16 %v362
        %v685 = vunpack.c.l.b16 %v363
        %v686 = vunpack.c.h.b16 %v363
        %v687 = vunpack.c.l.b16 %v364
        %v688 = vunpack.c.h.b16 %v364
        %v689 = vunpack.c.l.b16 %v365
        %v690 = vunpack.c.h.b16 %v365
        %v691 = vunpack.c.l.b16 %v366
        %v692 = vunpack.c.h.b16 %v366
        %v693 = vunpack.c.l.b16 %v367
        %v694 = vunpack.c.h.b16 %v367
        %v695 = vunpack.c.l.b16 %v368
        %v696 = vunpack.c.h.b16 %v368
        %v697 = vunpack.c.l.b16 %v369
        %v698 = vunpack.c.h.b16 %v369
        %v699 = vunpack.c.l.b16 %v370
        %v700 = vunpack.c.h.b16 %v370
        %v701 = vpack.c.b16 %v515, %v509
        %v702 = vpack.c.b16 %v516, %v510
        %v703 = vpack.c.b16 %v517, %v511
        %v704 = vpack.c.b16 %v518, %v512
        %v705 = vpack.c.b16 %v519, %v513
        %v706 = vpack.c.b16 %v520, %v514
        %v707 = vpack.c.b16 %v527, %v521
        %v708 = vpack.c.b16 %v528, %v522
        %v709 = vpack.c.b16 %v529, %v523
        %v710 = vpack.c.b16 %v530, %v524
        %v711 = vpack.c.b16 %v531, %v525
        %v712 = vpack.c.b16 %v532, %v526
        %v713 = vpack.c.b16 %v539, %v533
        %v714 = vpack.c.b16 %v540, %v534
        %v715 = vpack.c.b16 %v541, %v535
        %v716 = vpack.c.b16 %v542, %v536
        %v717 = vpack.c.b16 %v543, %v537
        %v718 = vpack.c.b16 %v544, %v538
        %v719 = vpack.c.b16 %v551, %v545
        %v720 = vpack.c.b16 %v552, %v546
        %v721 = vpack.c.b16 %v553, %v547
        %v722 = vpack.c.b16 %v554, %v548
        %v723 = vpack.c.b16 %v555, %v549
        %v724 = vpack.c.b16 %v556, %v550
        %v725 = vpack.c.b16 %v563, %v557
        %v726 = vpack.c.b16 %v564, %v558
        %v727 = vpack.c.b16 %v565, %v559
        %v728 = vpack.c.b16 %v566, %v560
        %v729 = vpack.c.b16 %v567, %v561
        %v730 = vpack.c.b16 %v568, %v562
        %v731 = vpack.c.b16 %v575, %v569
        %v732 = vpack.c.b16 %v576, %v570
        %v733 = vpack.c.b16 %v577, %v571
        %v734 = vpack.c.b16 %v578, %v572
        %v735 = vpack.c.b16 %v579, %v573
        %v736 = vpack.c.b16 %v580, %v574
        %v737 = vpack.c.b16 %v587, %v581
        %v738 = vpack.c.b16 %v588, %v582
        %v739 = vpack.c.b16 %v589, %v583
        %v740 = vpack.c.b16 %v590, %v584
        %v741 = vpack.c.b16 %v591, %v585
        %v742 = vpack.c.b16 %v592, %v586
        %v743 = vpack.c.b16 %v599, %v593
        %v744 = vpack.c.b16 %v600, %v594
        %v745 = vpack.c.b16 %v601, %v595
        %v746 = vpack.c.b16 %v602, %v596
        %v747 = vpack.c.b16 %v603, %v597
        %v748 = vpack.c.b16 %v604, %v598
        %v749 = vpack.c.b16 %v611, %v605
        %v750 = vpack.c.b16 %v612, %v606
        %v751 = vpack.c.b16 %v613, %v607
        %v752 = vpack.c.b16 %v614, %v608
        %v753 = vpack.c.b16 %v615, %v609
        %v754 = vpack.c.b16 %v616, %v610
        %v755 = vpack.c.b16 %v623, %v617
        %v756 = vpack.c.b16 %v624, %v618
        %v757 = vpack.c.b16 %v625, %v619
        %v758 = vpack.c.b16 %v626, %v620
        %v759 = vpack.c.b16 %v627, %v621
        %v760 = vpack.c.b16 %v628, %v622
        %v761 = vpack.c.b16 %v635, %v629
        %v762 = vpack.c.b16 %v636, %v630
        %v763 = vpack.c.b16 %v637, %v631
        %v764 = vpack.c.b16 %v638, %v632
        %v765 = vpack.c.b16 %v639, %v633
        %v766 = vpack.c.b16 %v640, %v634
        %v767 = vpack.c.b16 %v647, %v641
        %v768 = vpack.c.b16 %v648, %v642
        %v769 = vpack.c.b16 %v649, %v643
        %v770 = vpack.c.b16 %v650, %v644
        %v771 = vpack.c.b16 %v651, %v645
        %v772 = vpack.c.b16 %v652, %v646
        %v773 = vpack.c.b16 %v659, %v653
        %v774 = vpack.c.b16 %v660, %v654
        %v775 = vpack.c.b16 %v661, %v655
        %v776 = vpack.c.b16 %v662, %v656
        %v777 = vpack.c.b16 %v663, %v657
        %v778 = vpack.c.b16 %v664, %v658
        %v779 = vpack.c.b16 %v671, %v665
        %v780 = vpack.c.b16 %v672, %v666
        %v781 = vpack.c.b16 %v673, %v667
        %v782 = vpack.c.b16 %v674, %v668
        %v783 = vpack.c.b16 %v675, %v669
        %v784 = vpack.c.b16 %v676, %v670
        %v785 = vpack.c.b16 %v683, %v677
        %v786 = vpack.c.b16 %v684, %v678
        %v787 = vpack.c.b16 %v685, %v679
        %v788 = vpack.c.b16 %v686, %v680
        %v789 = vpack.c.b16 %v687, %v681
        %v790 = vpack.c.b16 %v688, %v682
        %v791 = vpack.c.b16 %v695, %v689
        %v792 = vpack.c.b16 %v696, %v690
        %v793 = vpack.c.b16 %v697, %v691
        %v794 = vpack.c.b16 %v698, %v692
        %v795 = vpack.c.b16 %v699, %v693
        %v796 = vpack.c.b16 %v700, %v694
        %893 = vmatprep.subr.bf16.mxu0 %v702
        %894 = vmatpush1.bf16.msra.mxu0 %v701
        %895 = vmatprep.subr.bf16.mxu0 %v708
        %896 = vmatpush1.bf16.msra.mxu0 %v707
        %897 = vmatprep.subr.bf16.mxu0 %v714
        %898 = vmatpush1.bf16.msra.mxu0 %v713
        %899 = vmatprep.subr.bf16.mxu0 %v720
        %900 = vmatpush1.bf16.msra.mxu0 %v719
        %901 = vmatprep.subr.bf16.mxu0 %v726
        %902 = vmatpush1.bf16.msra.mxu0 %v725
        %903 = vmatprep.subr.bf16.mxu0 %v732
        %904 = vmatpush1.bf16.msra.mxu0 %v731
        %905 = vmatprep.subr.bf16.mxu0 %v738
        %906 = vmatpush1.bf16.msra.mxu0 %v737
        %907 = vmatprep.subr.bf16.mxu0 %v744
        %908 = vmatpush1.bf16.msra.mxu0 %v743
        %909 = vmatprep.subr.bf16.mxu0 %v750
        %910 = vmatpush1.bf16.msra.mxu0 %v749
        %911 = vmatprep.subr.bf16.mxu0 %v756
        %912 = vmatpush1.bf16.msra.mxu0 %v755
        %913 = vmatprep.subr.bf16.mxu0 %v762
        %914 = vmatpush1.bf16.msra.mxu0 %v761
        %915 = vmatprep.subr.bf16.mxu0 %v768
        %916 = vmatpush1.bf16.msra.mxu0 %v767
        %917 = vmatprep.subr.bf16.mxu0 %v774
        %918 = vmatpush1.bf16.msra.mxu0 %v773
        %919 = vmatprep.subr.bf16.mxu0 %v780
        %920 = vmatpush1.bf16.msra.mxu0 %v779
        %921 = vmatprep.subr.bf16.mxu0 %v786
        %922 = vmatpush1.bf16.msra.mxu0 %v785
        %923 = vmatprep.subr.bf16.mxu0 %v792
        %924 = vmatpush1.bf16.msra.mxu0 %v791
        %925 = vmatprep.mubr.bf16.mxu0 %v410
        %926 = vmatmul.mubr.bf16.gmra.mrb[0].mxu0 %v409
        %v927 = vpop.f32.mrb[0].mxu0
        %v928 = vadd.f32 %v376, %v927
        %v929 = vpop.f32.mrb[0].mxu0
        %v930 = vadd.f32 %v380, %v929
        %v931 = vpop.f32.mrb[0].mxu0
        %v932 = vadd.f32 %v376, %v931
        %v933 = vpop.f32.mrb[0].mxu0
        %v934 = vadd.f32 %v380, %v933
        %935 = vdwg.mxu0
        %936 = vmatprep.subr.bf16.mxu0 %v704
        %937 = vmatpush1.bf16.msra.mxu0 %v703
        %938 = vmatprep.subr.bf16.mxu0 %v710
        %939 = vmatpush1.bf16.msra.mxu0 %v709
        %940 = vmatprep.subr.bf16.mxu0 %v716
        %941 = vmatpush1.bf16.msra.mxu0 %v715
        %942 = vmatprep.subr.bf16.mxu0 %v722
        %943 = vmatpush1.bf16.msra.mxu0 %v721
        %944 = vmatprep.subr.bf16.mxu0 %v728
        %945 = vmatpush1.bf16.msra.mxu0 %v727
        %946 = vmatprep.subr.bf16.mxu0 %v734
        %947 = vmatpush1.bf16.msra.mxu0 %v733
        %948 = vmatprep.subr.bf16.mxu0 %v740
        %949 = vmatpush1.bf16.msra.mxu0 %v739
        %950 = vmatprep.subr.bf16.mxu0 %v746
        %951 = vmatpush1.bf16.msra.mxu0 %v745
        %952 = vmatprep.subr.bf16.mxu0 %v752
        %953 = vmatpush1.bf16.msra.mxu0 %v751
        %954 = vmatprep.subr.bf16.mxu0 %v758
        %955 = vmatpush1.bf16.msra.mxu0 %v757
        %956 = vmatprep.subr.bf16.mxu0 %v764
        %957 = vmatpush1.bf16.msra.mxu0 %v763
        %958 = vmatprep.subr.bf16.mxu0 %v770
        %959 = vmatpush1.bf16.msra.mxu0 %v769
        %960 = vmatprep.subr.bf16.mxu0 %v776
        %961 = vmatpush1.bf16.msra.mxu0 %v775
        %962 = vmatprep.subr.bf16.mxu0 %v782
        %963 = vmatpush1.bf16.msra.mxu0 %v781
        %964 = vmatprep.subr.bf16.mxu0 %v788
        %965 = vmatpush1.bf16.msra.mxu0 %v787
        %966 = vmatprep.subr.bf16.mxu0 %v794
        %967 = vmatpush1.bf16.msra.mxu0 %v793
        %968 = vmatprep.mubr.bf16.mxu0 %v410
        %969 = vmatmul.mubr.bf16.gmra.mrb[0].mxu0 %v409
        %v970 = vpop.f32.mrb[0].mxu0
        %v971 = vadd.f32 %v384, %v970
        %v972 = vpop.f32.mrb[0].mxu0
        %v973 = vadd.f32 %v388, %v972
        %v974 = vpop.f32.mrb[0].mxu0
        %v975 = vadd.f32 %v384, %v974
        %v976 = vpop.f32.mrb[0].mxu0
        %v977 = vadd.f32 %v388, %v976
        %978 = vdwg.mxu0
        %979 = vmatprep.subr.bf16.mxu0 %v706
        %980 = vmatpush1.bf16.msra.mxu0 %v705
        %981 = vmatprep.subr.bf16.mxu0 %v712
        %982 = vmatpush1.bf16.msra.mxu0 %v711
        %983 = vmatprep.subr.bf16.mxu0 %v718
        %984 = vmatpush1.bf16.msra.mxu0 %v717
        %985 = vmatprep.subr.bf16.mxu0 %v724
        %986 = vmatpush1.bf16.msra.mxu0 %v723
        %987 = vmatprep.subr.bf16.mxu0 %v730
        %988 = vmatpush1.bf16.msra.mxu0 %v729
        %989 = vmatprep.subr.bf16.mxu0 %v736
        %990 = vmatpush1.bf16.msra.mxu0 %v735
        %991 = vmatprep.subr.bf16.mxu0 %v742
        %992 = vmatpush1.bf16.msra.mxu0 %v741
        %993 = vmatprep.subr.bf16.mxu0 %v748
        %994 = vmatpush1.bf16.msra.mxu0 %v747
        %995 = vmatprep.subr.bf16.mxu0 %v754
        %996 = vmatpush1.bf16.msra.mxu0 %v753
        %997 = vmatprep.subr.bf16.mxu0 %v760
        %998 = vmatpush1.bf16.msra.mxu0 %v759
        %999 = vmatprep.subr.bf16.mxu0 %v766
        %1000 = vmatpush1.bf16.msra.mxu0 %v765
        %1001 = vmatprep.subr.bf16.mxu0 %v772
        %1002 = vmatpush1.bf16.msra.mxu0 %v771
        %1003 = vmatprep.subr.bf16.mxu0 %v778
        %1004 = vmatpush1.bf16.msra.mxu0 %v777
        %1005 = vmatprep.subr.bf16.mxu0 %v784
        %1006 = vmatpush1.bf16.msra.mxu0 %v783
        %1007 = vmatprep.subr.bf16.mxu0 %v790
        %1008 = vmatpush1.bf16.msra.mxu0 %v789
        %1009 = vmatprep.subr.bf16.mxu0 %v796
        %1010 = vmatpush1.bf16.msra.mxu0 %v795
        %1011 = vmatprep.mubr.bf16.mxu0 %v410
        %1012 = vmatmul.mubr.bf16.gmra.mrb[0].mxu0 %v409
        %v1013 = vpop.f32.mrb[0].mxu0
        %v1014 = vadd.f32 %v392, %v1013
        %v1015 = vpop.f32.mrb[0].mxu0
        %v1016 = vadd.f32 %v396, %v1015
        %v1017 = vpop.f32.mrb[0].mxu0
        %v1018 = vadd.f32 %v392, %v1017
        %v1019 = vpop.f32.mrb[0].mxu0
        %v1020 = vadd.f32 %v396, %v1019
        %1021 = vdwg.mxu0
        %v1022 = vpack.c.bf16 %v932, %v928
        %v1023 = vpack.c.bf16 %v975, %v971
        %v1024 = vpack.c.bf16 %v1018, %v1014
        %1025 = vmatprep.subr.bf16.mxu0 0
        %1026 = vmatpush1.bf16.xpose.msra.mxu0 %v1023
        %1027 = vmatprep.subr.bf16.mxu0 0
        %1028 = vmatpush1.bf16.xpose.msra.mxu0 0
        %1029 = vmatprep.subr.bf16.mxu0 0
        %1030 = vmatpush1.bf16.xpose.msra.mxu0 0
        %1031 = vmatprep.subr.bf16.mxu0 0
        %1032 = vmatpush1.bf16.xpose.msra.mxu0 0
        %1033 = vmatprep.subr.bf16.mxu0 0
        %1034 = vmatpush1.bf16.xpose.msra.mxu0 0
        %1035 = vmatprep.subr.bf16.mxu0 0
        %1036 = vmatpush1.bf16.xpose.msra.mxu0 0
        %1037 = vmatprep.subr.bf16.mxu0 0
        %1038 = vmatpush1.bf16.xpose.msra.mxu0 0
        %1039 = vmatprep.subr.bf16.mxu0 0
        %1040 = vmatpush1.bf16.xpose.msra.mxu0 0
        %1041 = vmatprep.subr.bf16.mxu0 0
        %1042 = vmatpush1.bf16.xpose.msra.mxu0 0
        %1043 = vmatprep.subr.bf16.mxu0 0
        %1044 = vmatpush1.bf16.xpose.msra.mxu0 0
        %1045 = vmatprep.subr.bf16.mxu0 0
        %1046 = vmatpush1.bf16.xpose.msra.mxu0 0
        %1047 = vmatprep.subr.bf16.mxu0 0
        %1048 = vmatpush1.bf16.xpose.msra.mxu0 0
        %1049 = vmatprep.subr.bf16.mxu0 0
        %1050 = vmatpush1.bf16.xpose.msra.mxu0 0
        %1051 = vmatprep.subr.bf16.mxu0 0
        %1052 = vmatpush1.bf16.xpose.msra.mxu0 0
        %1053 = vmatprep.subr.bf16.mxu0 0
        %1054 = vmatpush1.bf16.xpose.msra.mxu0 0
        %1055 = vmatprep.subr.bf16.mxu0 0
        %1056 = vmatpush1.bf16.xpose.msra.mxu0 0
        %1057 = vmatprep.mubr.bf16.mxu0 0
        %1058 = vmatmul.mubr.bf16.gmra.mrb[0].mxu0 %v1022
        %v1059 = vpop.f32.mrb[0].mxu0
        %v1060 = vadd.f32 0.0, %v1059
        %v1061 = vpop.f32.mrb[0].mxu0
        %v1062 = vpop.f32.mrb[0].mxu0
        %v1063 = vadd.f32 0.0, %v1062
        %v1064 = vpop.f32.mrb[0].mxu0
        %1065 = vdwg.mxu0
        %vm1066 = vcmask 130048
        %v1067 = vsel %vm1066, %v1060, -inf
        %1068 = vmax.xlane.f32.xlu0 %v1067
        %v1069 = vpop.xlane.xlu0 %1068
        %v1070 = vsel %vm1066, %v1063, -inf
        %1071 = vmax.xlane.f32.xlu0 %v1070
        %v1072 = vpop.xlane.xlu0 %1071
        %v1073 = vsub.f32 %v1060, %v1069
        %v1074 = vsub.f32 %v1063, %v1072
        %v1075 = vmul.f32 %v1073, 1.442695
        %v1076 = vpow.pop %v1075
        %v1077 = vmul.f32 %v1074, 1.442695
        %v1078 = vpow.pop %v1077
        %v1079 = vsel %vm1066, %v1076, 0.0
        %1080 = vadd.xlane.f32.xlu0 %v1079
        %v1081 = vpop.xlane.xlu0 %1080
        %v1082 = vsel %vm1066, %v1078, 0.0
        %1083 = vadd.xlane.f32.xlu0 %v1082
        %v1084 = vpop.xlane.xlu0 %1083
        %v1085 = vrcp.pop %v1081
        %v1086 = vmul.f32 %v1076, %v1085
        %v1087 = vrcp.pop %v1084
        %v1088 = vmul.f32 %v1078, %v1087
        %v1089 = vpack.c.bf16 %v1088, %v1086
        %v1091 = vsel %vm1066, %v1089, 0
        %1093 = vmatprep.subr.bf16.mxu0 0
        %1094 = vmatpush1.bf16.msra.mxu0 %v1024
        %1095 = vmatprep.subr.bf16.mxu0 0
        %1096 = vmatpush1.bf16.msra.mxu0 0
        %1097 = vmatprep.subr.bf16.mxu0 0
        %1098 = vmatpush1.bf16.msra.mxu0 0
        %1099 = vmatprep.subr.bf16.mxu0 0
        %1100 = vmatpush1.bf16.msra.mxu0 0
        %1101 = vmatprep.subr.bf16.mxu0 0
        %1102 = vmatpush1.bf16.msra.mxu0 0
        %1103 = vmatprep.subr.bf16.mxu0 0
        %1104 = vmatpush1.bf16.msra.mxu0 0
        %1105 = vmatprep.subr.bf16.mxu0 0
        %1106 = vmatpush1.bf16.msra.mxu0 0
        %1107 = vmatprep.subr.bf16.mxu0 0
        %1108 = vmatpush1.bf16.msra.mxu0 0
        %1109 = vmatprep.subr.bf16.mxu0 0
        %1110 = vmatpush1.bf16.msra.mxu0 0
        %1111 = vmatprep.subr.bf16.mxu0 0
        %1112 = vmatpush1.bf16.msra.mxu0 0
        %1113 = vmatprep.subr.bf16.mxu0 0
        %1114 = vmatpush1.bf16.msra.mxu0 0
        %1115 = vmatprep.subr.bf16.mxu0 0
        %1116 = vmatpush1.bf16.msra.mxu0 0
        %1117 = vmatprep.subr.bf16.mxu0 0
        %1118 = vmatpush1.bf16.msra.mxu0 0
        %1119 = vmatprep.subr.bf16.mxu0 0
        %1120 = vmatpush1.bf16.msra.mxu0 0
        %1121 = vmatprep.subr.bf16.mxu0 0
        %1122 = vmatpush1.bf16.msra.mxu0 0
        %1123 = vmatprep.subr.bf16.mxu0 0
        %1124 = vmatpush1.bf16.msra.mxu0 0
        %1125 = vmatprep.mubr.bf16.mxu0 0
        %1126 = vmatmul.mubr.bf16.gmra.mrb[0].mxu0 %v1091
        %v1127 = vpop.f32.mrb[0].mxu0
        %v1128 = vadd.f32 0.0, %v1127
        %v1129 = vpop.f32.mrb[0].mxu0
        %v1130 = vpop.f32.mrb[0].mxu0
        %v1131 = vadd.f32 0.0, %v1130
        %v1132 = vpop.f32.mrb[0].mxu0
        %1133 = vdwg.mxu0
        %v1134 = vpack.c.bf16 %v934, %v930
        %v1135 = vpack.c.bf16 %v977, %v973
        %v1136 = vpack.c.bf16 %v1020, %v1016
        %1137 = vmatprep.subr.bf16.mxu0 0
        %1138 = vmatpush1.bf16.xpose.msra.mxu0 %v1135
        %1139 = vmatprep.subr.bf16.mxu0 0
        %1140 = vmatpush1.bf16.xpose.msra.mxu0 0
        %1141 = vmatprep.subr.bf16.mxu0 0
        %1142 = vmatpush1.bf16.xpose.msra.mxu0 0
        %1143 = vmatprep.subr.bf16.mxu0 0
        %1144 = vmatpush1.bf16.xpose.msra.mxu0 0
        %1145 = vmatprep.subr.bf16.mxu0 0
        %1146 = vmatpush1.bf16.xpose.msra.mxu0 0
        %1147 = vmatprep.subr.bf16.mxu0 0
        %1148 = vmatpush1.bf16.xpose.msra.mxu0 0
        %1149 = vmatprep.subr.bf16.mxu0 0
        %1150 = vmatpush1.bf16.xpose.msra.mxu0 0
        %1151 = vmatprep.subr.bf16.mxu0 0
        %1152 = vmatpush1.bf16.xpose.msra.mxu0 0
        %1153 = vmatprep.subr.bf16.mxu0 0
        %1154 = vmatpush1.bf16.xpose.msra.mxu0 0
        %1155 = vmatprep.subr.bf16.mxu0 0
        %1156 = vmatpush1.bf16.xpose.msra.mxu0 0
        %1157 = vmatprep.subr.bf16.mxu0 0
        %1158 = vmatpush1.bf16.xpose.msra.mxu0 0
        %1159 = vmatprep.subr.bf16.mxu0 0
        %1160 = vmatpush1.bf16.xpose.msra.mxu0 0
        %1161 = vmatprep.subr.bf16.mxu0 0
        %1162 = vmatpush1.bf16.xpose.msra.mxu0 0
        %1163 = vmatprep.subr.bf16.mxu0 0
        %1164 = vmatpush1.bf16.xpose.msra.mxu0 0
        %1165 = vmatprep.subr.bf16.mxu0 0
        %1166 = vmatpush1.bf16.xpose.msra.mxu0 0
        %1167 = vmatprep.subr.bf16.mxu0 0
        %1168 = vmatpush1.bf16.xpose.msra.mxu0 0
        %1169 = vmatprep.mubr.bf16.mxu0 0
        %1170 = vmatmul.mubr.bf16.gmra.mrb[0].mxu0 %v1134
        %v1171 = vpop.f32.mrb[0].mxu0
        %v1172 = vadd.f32 0.0, %v1171
        %v1173 = vpop.f32.mrb[0].mxu0
        %v1174 = vpop.f32.mrb[0].mxu0
        %v1175 = vadd.f32 0.0, %v1174
        %v1176 = vpop.f32.mrb[0].mxu0
        %1177 = vdwg.mxu0
        %v1178 = vsel %vm1066, %v1172, -inf
        %1179 = vmax.xlane.f32.xlu0 %v1178
        %v1180 = vpop.xlane.xlu0 %1179
        %v1181 = vsel %vm1066, %v1175, -inf
        %1182 = vmax.xlane.f32.xlu0 %v1181
        %v1183 = vpop.xlane.xlu0 %1182
        %v1184 = vsub.f32 %v1172, %v1180
        %v1185 = vsub.f32 %v1175, %v1183
        %v1186 = vmul.f32 %v1184, 1.442695
        %v1187 = vpow.pop %v1186
        %v1188 = vmul.f32 %v1185, 1.442695
        %v1189 = vpow.pop %v1188
        %v1190 = vsel %vm1066, %v1187, 0.0
        %1191 = vadd.xlane.f32.xlu0 %v1190
        %v1192 = vpop.xlane.xlu0 %1191
        %v1193 = vsel %vm1066, %v1189, 0.0
        %1194 = vadd.xlane.f32.xlu0 %v1193
        %v1195 = vpop.xlane.xlu0 %1194
        %v1196 = vrcp.pop %v1192
        %v1197 = vmul.f32 %v1187, %v1196
        %v1198 = vrcp.pop %v1195
        %v1199 = vmul.f32 %v1189, %v1198
        %v1200 = vpack.c.bf16 %v1199, %v1197
        %v1202 = vsel %vm1066, %v1200, 0
        %1204 = vmatprep.subr.bf16.mxu0 0
        %1205 = vmatpush1.bf16.msra.mxu0 %v1136
        %1206 = vmatprep.subr.bf16.mxu0 0
        %1207 = vmatpush1.bf16.msra.mxu0 0
        %1208 = vmatprep.subr.bf16.mxu0 0
        %1209 = vmatpush1.bf16.msra.mxu0 0
        %1210 = vmatprep.subr.bf16.mxu0 0
        %1211 = vmatpush1.bf16.msra.mxu0 0
        %1212 = vmatprep.subr.bf16.mxu0 0
        %1213 = vmatpush1.bf16.msra.mxu0 0
        %1214 = vmatprep.subr.bf16.mxu0 0
        %1215 = vmatpush1.bf16.msra.mxu0 0
        %1216 = vmatprep.subr.bf16.mxu0 0
        %1217 = vmatpush1.bf16.msra.mxu0 0
        %1218 = vmatprep.subr.bf16.mxu0 0
        %1219 = vmatpush1.bf16.msra.mxu0 0
        %1220 = vmatprep.subr.bf16.mxu0 0
        %1221 = vmatpush1.bf16.msra.mxu0 0
        %1222 = vmatprep.subr.bf16.mxu0 0
        %1223 = vmatpush1.bf16.msra.mxu0 0
        %1224 = vmatprep.subr.bf16.mxu0 0
        %1225 = vmatpush1.bf16.msra.mxu0 0
        %1226 = vmatprep.subr.bf16.mxu0 0
        %1227 = vmatpush1.bf16.msra.mxu0 0
        %1228 = vmatprep.subr.bf16.mxu0 0
        %1229 = vmatpush1.bf16.msra.mxu0 0
        %1230 = vmatprep.subr.bf16.mxu0 0
        %1231 = vmatpush1.bf16.msra.mxu0 0
        %1232 = vmatprep.subr.bf16.mxu0 0
        %1233 = vmatpush1.bf16.msra.mxu0 0
        %1234 = vmatprep.subr.bf16.mxu0 0
        %1235 = vmatpush1.bf16.msra.mxu0 0
        %1236 = vmatprep.mubr.bf16.mxu0 0
        %1237 = vmatmul.mubr.bf16.gmra.mrb[0].mxu0 %v1202
        %v1238 = vpop.f32.mrb[0].mxu0
        %v1239 = vadd.f32 0.0, %v1238
        %v1240 = vpop.f32.mrb[0].mxu0
        %v1241 = vpop.f32.mrb[0].mxu0
        %v1242 = vadd.f32 0.0, %v1241
        %v1243 = vpop.f32.mrb[0].mxu0
        %1244 = vdwg.mxu0
        %v1245 = vpack.c.bf16 %v1131, %v1128
        %v1246 = vpack.c.bf16 %v1242, %v1239
        %v1247 = vld [vmem:[#allocation7] sm:$0xff]
        %v1248 = vld [vmem:[#allocation7 + $0x8] sm:$0xff]
        %v1249 = vld [vmem:[#allocation7 + $0x10] sm:$0xff]
        %v1250 = vld [vmem:[#allocation7 + $0x18] sm:$0xff]
        %v1251 = vld [vmem:[#allocation7 + $0x20] sm:$0xff]
        %v1252 = vld [vmem:[#allocation7 + $0x28] sm:$0xff]
        %v1253 = vld [vmem:[#allocation7 + $0x30] sm:$0xff]
        %v1254 = vld [vmem:[#allocation7 + $0x38] sm:$0xff]
        %v1255 = vld [vmem:[#allocation7 + $0x40] sm:$0xff]
        %v1256 = vld [vmem:[#allocation7 + $0x48] sm:$0xff]
        %v1257 = vld [vmem:[#allocation7 + $0x50] sm:$0xff]
        %v1258 = vld [vmem:[#allocation7 + $0x58] sm:$0xff]
        %v1259 = vld [vmem:[#allocation7 + $0x60] sm:$0xff]
        %v1260 = vld [vmem:[#allocation7 + $0x68] sm:$0xff]
        %v1261 = vld [vmem:[#allocation7 + $0x70] sm:$0xff]
        %v1262 = vld [vmem:[#allocation7 + $0x78] sm:$0xff]
        %v1263 = vld [vmem:[#allocation7 + $0x80] sm:$0xff]
        %v1264 = vld [vmem:[#allocation7 + $0x88] sm:$0xff]
        %v1265 = vld [vmem:[#allocation7 + $0x90] sm:$0xff]
        %v1266 = vld [vmem:[#allocation7 + $0x98] sm:$0xff]
        %v1267 = vld [vmem:[#allocation7 + $0xa0] sm:$0xff]
        %v1268 = vld [vmem:[#allocation7 + $0xa8] sm:$0xff]
        %v1269 = vld [vmem:[#allocation7 + $0xb0] sm:$0xff]
        %v1270 = vld [vmem:[#allocation7 + $0xb8] sm:$0xff]
        %v1271 = vld [vmem:[#allocation7 + $0xc0] sm:$0xff]
        %v1272 = vld [vmem:[#allocation7 + $0xc8] sm:$0xff]
        %v1273 = vld [vmem:[#allocation7 + $0xd0] sm:$0xff]
        %v1274 = vld [vmem:[#allocation7 + $0xd8] sm:$0xff]
        %v1275 = vld [vmem:[#allocation7 + $0xe0] sm:$0xff]
        %v1276 = vld [vmem:[#allocation7 + $0xe8] sm:$0xff]
        %v1277 = vld [vmem:[#allocation7 + $0xf0] sm:$0xff]
        %v1278 = vld [vmem:[#allocation7 + $0xf8] sm:$0xff]
        %v1279 = vld [vmem:[%s4] sm:$0x3]
        %v1281 = vlaneseq
        %v1282 = vshrl.u32 %v1281, 7
        %v1283 = vsub.s32 0, %v1282
        %v1284 = vrot.slane %v1279, %v1283
        %v1285 = vlaneseq
        %v1286 = vshrl.u32 %v1285, 7
        %v1287 = vsub.s32 1, %v1286
        %v1288 = vrot.slane %v1279, %v1287
        %v1323 = vunpack.c.l.b16 %v1247
        %v1324 = vunpack.c.h.b16 %v1247
        %v1325 = vunpack.c.l.b16 %v1248
        %v1326 = vunpack.c.h.b16 %v1248
        %v1327 = vunpack.c.l.b16 %v1249
        %v1328 = vunpack.c.h.b16 %v1249
        %v1329 = vunpack.c.l.b16 %v1250
        %v1330 = vunpack.c.h.b16 %v1250
        %v1331 = vunpack.c.l.b16 %v1251
        %v1332 = vunpack.c.h.b16 %v1251
        %v1333 = vunpack.c.l.b16 %v1252
        %v1334 = vunpack.c.h.b16 %v1252
        %v1335 = vunpack.c.l.b16 %v1253
        %v1336 = vunpack.c.h.b16 %v1253
        %v1337 = vunpack.c.l.b16 %v1254
        %v1338 = vunpack.c.h.b16 %v1254
        %v1339 = vunpack.c.l.b16 %v1255
        %v1340 = vunpack.c.h.b16 %v1255
        %v1341 = vunpack.c.l.b16 %v1256
        %v1342 = vunpack.c.h.b16 %v1256
        %v1343 = vunpack.c.l.b16 %v1257
        %v1344 = vunpack.c.h.b16 %v1257
        %v1345 = vunpack.c.l.b16 %v1258
        %v1346 = vunpack.c.h.b16 %v1258
        %v1347 = vunpack.c.l.b16 %v1259
        %v1348 = vunpack.c.h.b16 %v1259
        %v1349 = vunpack.c.l.b16 %v1260
        %v1350 = vunpack.c.h.b16 %v1260
        %v1351 = vunpack.c.l.b16 %v1261
        %v1352 = vunpack.c.h.b16 %v1261
        %v1353 = vunpack.c.l.b16 %v1262
        %v1354 = vunpack.c.h.b16 %v1262
        %v1355 = vunpack.c.l.b16 %v1263
        %v1356 = vunpack.c.h.b16 %v1263
        %v1357 = vunpack.c.l.b16 %v1264
        %v1358 = vunpack.c.h.b16 %v1264
        %v1359 = vunpack.c.l.b16 %v1265
        %v1360 = vunpack.c.h.b16 %v1265
        %v1361 = vunpack.c.l.b16 %v1266
        %v1362 = vunpack.c.h.b16 %v1266
        %v1363 = vunpack.c.l.b16 %v1267
        %v1364 = vunpack.c.h.b16 %v1267
        %v1365 = vunpack.c.l.b16 %v1268
        %v1366 = vunpack.c.h.b16 %v1268
        %v1367 = vunpack.c.l.b16 %v1269
        %v1368 = vunpack.c.h.b16 %v1269
        %v1369 = vunpack.c.l.b16 %v1270
        %v1370 = vunpack.c.h.b16 %v1270
        %v1371 = vunpack.c.l.b16 %v1271
        %v1372 = vunpack.c.h.b16 %v1271
        %v1373 = vunpack.c.l.b16 %v1272
        %v1374 = vunpack.c.h.b16 %v1272
        %v1375 = vunpack.c.l.b16 %v1273
        %v1376 = vunpack.c.h.b16 %v1273
        %v1377 = vunpack.c.l.b16 %v1274
        %v1378 = vunpack.c.h.b16 %v1274
        %v1379 = vunpack.c.l.b16 %v1275
        %v1380 = vunpack.c.h.b16 %v1275
        %v1381 = vunpack.c.l.b16 %v1276
        %v1382 = vunpack.c.h.b16 %v1276
        %v1383 = vunpack.c.l.b16 %v1277
        %v1384 = vunpack.c.h.b16 %v1277
        %v1385 = vunpack.c.l.b16 %v1278
        %v1386 = vunpack.c.h.b16 %v1278
        %v1387 = vpack.c.b16 %v1325, %v1323
        %v1388 = vpack.c.b16 %v1326, %v1324
        %v1389 = vpack.c.b16 %v1329, %v1327
        %v1390 = vpack.c.b16 %v1330, %v1328
        %v1391 = vpack.c.b16 %v1333, %v1331
        %v1392 = vpack.c.b16 %v1334, %v1332
        %v1393 = vpack.c.b16 %v1337, %v1335
        %v1394 = vpack.c.b16 %v1338, %v1336
        %v1395 = vpack.c.b16 %v1341, %v1339
        %v1396 = vpack.c.b16 %v1342, %v1340
        %v1397 = vpack.c.b16 %v1345, %v1343
        %v1398 = vpack.c.b16 %v1346, %v1344
        %v1399 = vpack.c.b16 %v1349, %v1347
        %v1400 = vpack.c.b16 %v1350, %v1348
        %v1401 = vpack.c.b16 %v1353, %v1351
        %v1402 = vpack.c.b16 %v1354, %v1352
        %v1403 = vpack.c.b16 %v1357, %v1355
        %v1404 = vpack.c.b16 %v1358, %v1356
        %v1405 = vpack.c.b16 %v1361, %v1359
        %v1406 = vpack.c.b16 %v1362, %v1360
        %v1407 = vpack.c.b16 %v1365, %v1363
        %v1408 = vpack.c.b16 %v1366, %v1364
        %v1409 = vpack.c.b16 %v1369, %v1367
        %v1410 = vpack.c.b16 %v1370, %v1368
        %v1411 = vpack.c.b16 %v1373, %v1371
        %v1412 = vpack.c.b16 %v1374, %v1372
        %v1413 = vpack.c.b16 %v1377, %v1375
        %v1414 = vpack.c.b16 %v1378, %v1376
        %v1415 = vpack.c.b16 %v1381, %v1379
        %v1416 = vpack.c.b16 %v1382, %v1380
        %v1417 = vpack.c.b16 %v1385, %v1383
        %v1418 = vpack.c.b16 %v1386, %v1384
        %1451 = vmatprep.subr.bf16.mxu0 %v1388
        %1452 = vmatpush1.bf16.msra.mxu0 %v1387
        %1453 = vmatprep.subr.bf16.mxu0 %v1390
        %1454 = vmatpush1.bf16.msra.mxu0 %v1389
        %1455 = vmatprep.subr.bf16.mxu0 %v1392
        %1456 = vmatpush1.bf16.msra.mxu0 %v1391
        %1457 = vmatprep.subr.bf16.mxu0 %v1394
        %1458 = vmatpush1.bf16.msra.mxu0 %v1393
        %1459 = vmatprep.subr.bf16.mxu0 %v1396
        %1460 = vmatpush1.bf16.msra.mxu0 %v1395
        %1461 = vmatprep.subr.bf16.mxu0 %v1398
        %1462 = vmatpush1.bf16.msra.mxu0 %v1397
        %1463 = vmatprep.subr.bf16.mxu0 %v1400
        %1464 = vmatpush1.bf16.msra.mxu0 %v1399
        %1465 = vmatprep.subr.bf16.mxu0 %v1402
        %1466 = vmatpush1.bf16.msra.mxu0 %v1401
        %1467 = vmatprep.subr.bf16.mxu0 %v1404
        %1468 = vmatpush1.bf16.msra.mxu0 %v1403
        %1469 = vmatprep.subr.bf16.mxu0 %v1406
        %1470 = vmatpush1.bf16.msra.mxu0 %v1405
        %1471 = vmatprep.subr.bf16.mxu0 %v1408
        %1472 = vmatpush1.bf16.msra.mxu0 %v1407
        %1473 = vmatprep.subr.bf16.mxu0 %v1410
        %1474 = vmatpush1.bf16.msra.mxu0 %v1409
        %1475 = vmatprep.subr.bf16.mxu0 %v1412
        %1476 = vmatpush1.bf16.msra.mxu0 %v1411
        %1477 = vmatprep.subr.bf16.mxu0 %v1414
        %1478 = vmatpush1.bf16.msra.mxu0 %v1413
        %1479 = vmatprep.subr.bf16.mxu0 %v1416
        %1480 = vmatpush1.bf16.msra.mxu0 %v1415
        %1481 = vmatprep.subr.bf16.mxu0 %v1418
        %1482 = vmatpush1.bf16.msra.mxu0 %v1417
        %1483 = vmatprep.mubr.bf16.mxu0 %v1246
        %1484 = vmatmul.mubr.bf16.gmra.mrb[0].mxu0 %v1245
        %v1485 = vpop.f32.mrb[0].mxu0
        %v1486 = vadd.f32 %v1284, %v1485
        %v1487 = vpop.f32.mrb[0].mxu0
        %v1488 = vadd.f32 %v1288, %v1487
        %v1489 = vpop.f32.mrb[0].mxu0
        %v1490 = vadd.f32 %v1284, %v1489
        %v1491 = vpop.f32.mrb[0].mxu0
        %v1492 = vadd.f32 %v1288, %v1491
        %1493 = vdwg.mxu0
        %1494 = vst [vmem:[%s271] sm:$0xff] %v1486
        %1495 = vst [vmem:[%s271 + $0x8] sm:$0xff] %v1488
        %1496 = vst [vmem:[%s271 + $0x10] sm:$0xff] %v1490
        %1497 = vst [vmem:[%s271 + $0x18] sm:$0xff] %v1492
        %s1498 = sand.u32 %s141, 1
        %s1499 = scalar_lea.sflag [#allocation4], %s1498
        %s1500 = sand.u32 %s141, 1
        %s1501 = smul.addr %s1500, 32
        %s1502 = scalar_lea.vmem [#allocation8], %s1501
        // Predicated region
        $region53: #{tpu_custom_call.1} parent=39 // pred_check
          %p1503 = pneg %p151
        $region54: #{tpu_custom_call.1} parent=39 // pred_check_branch
          %1505 = sbr.rel (%p1503) target = $region56
        $region55: #{tpu_custom_call.1} parent=39 // pred_region
          %s1507 = ssub.s32 512, 512
          %1508 = vsyncadd %s1499, %s1507
          %s1509 = smul.addr %s23, 4
          %s1510 = smul.addr %s1509, 128
          %s1511 = scalar_lea.hbm %s5, %s1510
          %s1512 = sshll.u32 %s1502, 4
          %s1513 = int_to_ptr.vmem [resolvable:$true] %s1512
          %1518 = dma.vmem_to_hbm [thread:$0]  %s1513, 512, %s1511, %s1499, 256, 256, 16
        $region56: #{tpu_custom_call.1} parent=39 // pred_fallthru
          _
      $region40: #{tpu_custom_call.1} parent=5 // pred_fallthru
        _
      %p1519 = scmp.le.s32.totalorder 2, %s18
      // Predicated region
      $region57: #{tpu_custom_call.1} parent=5 // pred_check
        %p1520 = pneg %p1519
      $region58: #{tpu_custom_call.1} parent=5 // pred_check_branch
        %1522 = sbr.rel (%p1520) target = $region60
      $region59: #{tpu_custom_call.1} parent=5 // pred_region
        %s1523 = ssub.s32 %s18, 2
        // Predicated region
        $region61: #{tpu_custom_call.1} parent=59 // pred_check
          %p1524 = pneg %p157
        $region62: #{tpu_custom_call.1} parent=59 // pred_check_branch
          %1526 = sbr.rel (%p1524) target = $region64
        $region63: #{tpu_custom_call.1} parent=59 // pred_region
          %s1527 = sand.u32 %s142, 1
          %s1528 = scalar_lea.sflag [#allocation4], %s1527
          %s1529 = sand.u32 %s142, 1
          %s1530 = smul.addr %s1529, 32
          %s1531 = scalar_lea.vmem [#allocation8], %s1530
          %1532 = dma.done %s1528, 512
        $region64: #{tpu_custom_call.1} parent=59 // pred_fallthru
          _
      $region60: #{tpu_custom_call.1} parent=5 // pred_fallthru
        _
    $region6: #{tpu_custom_call.1} parent=1 // loop_footer
      %s22 = sadd.s32 1, %s18
    $region7: #{tpu_custom_call.1} parent=1 // loop_footer_branch
      %17 = sbr.rel target = $region3
    $region8: #{tpu_custom_call.1} parent=1 // loop_exit
      _
    %1533 = vsyncpa [#allocation3], 1
    %s1534 = scalar_lea.sflag [#allocation3], 1
    %1535 = vsyncpa %s1534, 1
    %1536 = vsyncpa [#allocation6], 1
    %1537 = vsyncpa [#allocation4], 1
    %s1538 = scalar_lea.sflag [#allocation4], 1
    %1539 = vsyncpa %s1538, 1

</llo_original>
